<compile_context>
chip_gen: v5e
topology: v5e:2x2
jax: 0.10.0
libtpu: 0.0.40
codegen_flags: <defaults>
</compile_context>

<pallas_src>
import math
from functools import partial

import jax
import jax.numpy as jnp
from jax import lax
from jax.experimental import pallas as pl
from jax.experimental.pallas import tpu as pltpu

EPS = 1e-5  # nn.LayerNorm default eps
LOG2E = math.log2(math.e)


def _layernorm(v, w, b):
    mu = jnp.mean(v, axis=-1, keepdims=True)
    var = jnp.mean((v - mu) ** 2, axis=-1, keepdims=True)
    return (v - mu) * lax.rsqrt(var + EPS) * w + b


def _gelu_exact(x):
    # nn.GELU() default = exact erf-based GELU
    return 0.5 * x * (1.0 + lax.erf(x * (1.0 / math.sqrt(2.0))))


def expert_block_kernel(
    scale_ref,                  # (1,)   f32 SMEM   runtime ghost scale (1.0 if not ghost)
    x_ref,                      # (1, S, E)         full sequence for this batch element
    n1w_ref, n1b_ref,           # (1, E) f32
    wq_ref, wk_ref, wv_ref,     # (E, E) bf16       wq/bq pre-scaled by log2(e)/sqrt(DH)
    bq_ref, bk_ref, bv_ref,     # (1, E) f32
    wo_ref, bo_ref,             # (E, E) bf16, (1, E) f32
    n2w_ref, n2b_ref,           # (1, E) f32
    w1_ref, b1_ref,             # (E, 4E) bf16, (1, 4E) f32
    w2_ref, b2_ref,             # (4E, E) bf16, (1, E) f32
    o_ref,                      # (1, TQ, E)
    kh_ref, vh_ref,             # VMEM scratch (H, S, DH) bf16, persists across query tiles
    *, num_heads, head_dim, q_tile,
):
    f32, bf16 = jnp.float32, jnp.bfloat16
    H, DH, TQ = num_heads, head_dim, q_tile
    S, E = x_ref.shape[1], x_ref.shape[2]
    qi = pl.program_id(1)

    # ---- K/V for the whole sequence: computed once per batch element, cached in VMEM ----
    @pl.when(qi == 0)
    def _():
        xn = _layernorm(x_ref[0].astype(f32), n1w_ref[...], n1b_ref[...]).astype(bf16)
        k = jnp.dot(xn, wk_ref[...], preferred_element_type=f32) + bk_ref[...]
        v = jnp.dot(xn, wv_ref[...], preferred_element_type=f32) + bv_ref[...]
        # (S, E) -> (H, S, DH): single reshape+transpose layout pass per tensor
        kh_ref[...] = jnp.swapaxes(k.reshape(S, H, DH), 0, 1).astype(bf16)
        vh_ref[...] = jnp.swapaxes(v.reshape(S, H, DH), 0, 1).astype(bf16)

    # ---- query tile ---------------------------------------------------------------------
    row0 = pl.multiple_of(qi * TQ, TQ)
    xq = x_ref[0, pl.ds(row0, TQ), :].astype(f32)                    # (TQ, E)
    xqn = _layernorm(xq, n1w_ref[...], n1b_ref[...]).astype(bf16)
    # wq/bq already carry log2(e)/sqrt(DH): scores land directly in the exp2 domain.
    q = jnp.dot(xqn, wq_ref[...], preferred_element_type=f32) + bq_ref[...]
    qh = jnp.swapaxes(q.reshape(TQ, H, DH), 0, 1).astype(bf16)       # (H, TQ, DH)

    s = jnp.einsum("hqd,hkd->hqk", qh, kh_ref[...],
                   preferred_element_type=f32)                       # (H, TQ, S)
    p = jnp.exp2(s - jnp.max(s, axis=-1, keepdims=True))             # unnormalized
    l = jnp.sum(p, axis=-1, keepdims=True)                           # (H, TQ, 1)
    av = jnp.einsum("hqk,hkd->hqd", p.astype(bf16), vh_ref[...],
                    preferred_element_type=f32)                      # (H, TQ, DH)
    av = av * pl.reciprocal(l, approx=True)                          # deferred softmax norm

    attn_cat = jnp.swapaxes(av, 0, 1).reshape(TQ, H * DH)            # (TQ, E), one layout op
    attn = jnp.dot(attn_cat.astype(bf16), wo_ref[...],
                   preferred_element_type=f32) + bo_ref[...]
    x1 = xq + attn                                                   # residual 1

    # ---- FFN on this row tile -----------------------------------------------------------
    xn2 = _layernorm(x1, n2w_ref[...], n2b_ref[...]).astype(bf16)
    h1 = jnp.dot(xn2, w1_ref[...], preferred_element_type=f32) + b1_ref[...]
    h1 = _gelu_exact(h1).astype(bf16)                                # f32 copy dies here
    ffn = jnp.dot(h1, w2_ref[...], preferred_element_type=f32) + b2_ref[...]

    # residual 2 + runtime ghost scaling (SMEM scalar; 1.0 when not a ghost)
    out = (x1 + ffn) * scale_ref[0]
    o_ref[0] = out.astype(o_ref.dtype)


def _pick_q_tile(S, target=256):
    if S <= target:
        return S
    for t in range(target, 7, -1):
        if S % t == 0 and t % 8 == 0:
            return t
    return S


def _vmem_capacity_bytes():
    try:
        return int(pltpu.get_tpu_info().vmem_capacity_bytes)
    except Exception:
        return 64 * 2**20  # conservative: v7x per-TensorCore VMEM


def prepare_expert_params(params, num_heads):
    """One-time weight preparation (transpose / bf16 cast / scale folding). Cache the result."""
    E = params["out_proj_w"].shape[0]
    assert E % num_heads == 0
    DH = E // num_heads
    bf16, f32 = jnp.bfloat16, jnp.float32

    def row(v):
        return v.reshape(1, -1).astype(f32)

    c = LOG2E / math.sqrt(DH)  # softmax scale + exp2 base-change folded into Q projection
    ipw, ipb = params["in_proj_w"], params["in_proj_b"]   # (3E, E), (3E,) PyTorch layout
    return (
        row(params["n1_w"]), row(params["n1_b"]),
        (ipw[:E].T * c).astype(bf16),
        ipw[E:2 * E].T.astype(bf16),
        ipw[2 * E:].T.astype(bf16),
        row(ipb[:E] * c), row(ipb[E:2 * E]), row(ipb[2 * E:]),
        params["out_proj_w"].T.astype(bf16), row(params["out_proj_b"]),
        row(params["n2_w"]), row(params["n2_b"]),
        params["ffn_w1"].T.astype(bf16), row(params["ffn_b1"]),
        params["ffn_w2"].T.astype(bf16), row(params["ffn_b2"]),
    )


def ghost_aware_expert_block(x, prepared, *, num_heads, is_ghost, activation_level):
    B, S, E = x.shape
    H = num_heads
    DH = E // H
    TQ = _pick_q_tile(S)
    NQ = S // TQ

    # Runtime scalar (SMEM operand) -> no recompile when activation_level mutates.
    scale = jnp.asarray([float(activation_level) if is_ghost else 1.0], jnp.float32)

    smem_spec = pl.BlockSpec(memory_space=pltpu.MemorySpace.SMEM)
    vmem_spec = pl.BlockSpec(memory_space=pltpu.MemorySpace.VMEM)  # whole-array resident
    x_spec = pl.BlockSpec((1, S, E), lambda b, qi: (b, 0, 0))      # invariant across qi
    in_specs = [smem_spec, x_spec] + [vmem_spec] * len(prepared)
    out_spec = pl.BlockSpec((1, TQ, E), lambda b, qi: (b, qi, 0))

    scratch_shapes = [
        pltpu.VMEM((H, S, DH), jnp.bfloat16),   # cached K (per-head layout)
        pltpu.VMEM((H, S, DH), jnp.bfloat16),   # cached V
    ]

    # Generation-aware VMEM budget (v7x: 64 MiB/TC; v5e/v6e: 128 MiB).
    cap = _vmem_capacity_bytes()
    param_bytes = sum(int(a.size) * a.dtype.itemsize for a in prepared)
    io_bytes = 2 * S * E * x.dtype.itemsize + 2 * TQ * E * x.dtype.itemsize
    scratch_bytes = 2 * H * S * DH * 2
    interm_bytes = 4 * (3 * S * E + 2 * H * TQ * S + 2 * TQ * 4 * E + 4 * TQ * E)
    need = param_bytes + io_bytes + scratch_bytes + interm_bytes
    vmem_limit = int(min(int(0.85 * cap), max(32 * 2**20, 2 * need)))

    flops = int(B * (24 * S * E * E + 4 * S * S * E))               # qkv/out/ffn + scores/AV
    cost = pl.CostEstimate(
        flops=flops,
        transcendentals=int(B * (H * S * S + S * 4 * E)),           # softmax exp2 + GELU erf
        bytes_accessed=int(2 * x.size * x.dtype.itemsize + param_bytes),
    )

    kernel = partial(expert_block_kernel, num_heads=H, head_dim=DH, q_tile=TQ)

    return pl.pallas_call(
        kernel,
        out_shape=jax.ShapeDtypeStruct((B, S, E), x.dtype),
        grid_spec=pltpu.PrefetchScalarGridSpec(
            num_scalar_prefetch=0,
            grid=(B, NQ),
            in_specs=in_specs,
            out_specs=out_spec,
            scratch_shapes=scratch_shapes,
        ),
        compiler_params=pltpu.CompilerParams(
            # qi must be "arbitrary": K/V scratch written at qi==0 is reused by later tiles.
            dimension_semantics=("parallel", "arbitrary"),
            vmem_limit_bytes=vmem_limit,
        ),
        cost_estimate=cost,
    )(scale, x, *prepared)


# ---------------------------- pure-JAX reference (f32) -------------------------------
def reference_forward(x, params, *, num_heads, is_ghost, activation_level):
    def ln(v, w, b):
        mu = v.mean(-1, keepdims=True)
        var = ((v - mu) ** 2).mean(-1, keepdims=True)
        return (v - mu) / jnp.sqrt(var + EPS) * w + b

    B, S, E = x.shape
    DH = E // num_heads
    xn = ln(x, params["n1_w"], params["n1_b"])
    qkv = xn @ params["in_proj_w"].T + params["in_proj_b"]
    q, k, v = jnp.split(qkv, 3, axis=-1)

    def heads(t):
        return t.reshape(B, S, num_heads, DH).transpose(0, 2, 1, 3)

    qh, kh, vh = heads(q), heads(k), heads(v)
    s = jnp.einsum("bhqd,bhkd->bhqk", qh, kh) / math.sqrt(DH)
    p = jax.nn.softmax(s, axis=-1)
    a = jnp.einsum("bhqk,bhkd->bhqd", p, vh).transpose(0, 2, 1, 3).reshape(B, S, E)
    attn = a @ params["out_proj_w"].T + params["out_proj_b"]
    x = x + attn
    xn2 = ln(x, params["n2_w"], params["n2_b"])
    h = jax.nn.gelu(xn2 @ params["ffn_w1"].T + params["ffn_b1"], approximate=False)
    out = x + h @ params["ffn_w2"].T + params["ffn_b2"]
    if is_ghost:
        out = out * activation_level
    return out


def make_params(key, embed_dim):
    E = embed_dim
    ks = jax.random.split(key, 8)
    scale = 0.05
    return {
        "n1_w": jnp.ones((E,), jnp.float32),
        "n1_b": jnp.zeros((E,), jnp.float32),
        "in_proj_w": scale * jax.random.normal(ks[0], (3 * E, E), jnp.float32),
        "in_proj_b": scale * jax.random.normal(ks[1], (3 * E,), jnp.float32),
        "out_proj_w": scale * jax.random.normal(ks[2], (E, E), jnp.float32),
        "out_proj_b": scale * jax.random.normal(ks[3], (E,), jnp.float32),
        "n2_w": jnp.ones((E,), jnp.float32),
        "n2_b": jnp.zeros((E,), jnp.float32),
        "ffn_w1": scale * jax.random.normal(ks[4], (4 * E, E), jnp.float32),
        "ffn_b1": scale * jax.random.normal(ks[5], (4 * E,), jnp.float32),
        "ffn_w2": scale * jax.random.normal(ks[6], (E, 4 * E), jnp.float32),
        "ffn_b2": scale * jax.random.normal(ks[7], (E,), jnp.float32),
    }


if __name__ == "__main__":
    B, S, E, H = 2, 8, 32, 4
    key = jax.random.PRNGKey(0)
    kx, kp = jax.random.split(key)
    x = jax.random.normal(kx, (B, S, E), jnp.float32)
    params = make_params(kp, E)

    # Ghost expert with a nonzero activation_level so the scaling path is exercised.
    # activation_level is runtime-mutable: it is passed as an SMEM scalar (no recompile).
    is_ghost, activation_level = True, 0.7

    prepared = prepare_expert_params(params, num_heads=H)   # one-time weight prep (cache me)

    out = ghost_aware_expert_block(
        x, prepared, num_heads=H, is_ghost=is_ghost, activation_level=activation_level
    )
    out = jax.block_until_ready(out)

    ref = reference_forward(
        x, params, num_heads=H, is_ghost=is_ghost, activation_level=activation_level
    )
    assert out.shape == (B, S, E)
    max_err = float(jnp.max(jnp.abs(out - ref)))
    # Tolerance vs. the f32 reference: matmul operands are bf16 (f32 accumulation) and the
    # softmax denominator uses the EUP-approximate reciprocal.
    assert jnp.allclose(out, ref, atol=2e-2, rtol=2e-2), max_err

    # Changing activation_level must not require a recompile (runtime SMEM scalar).
    out2 = jax.block_until_ready(
        ghost_aware_expert_block(x, prepared, num_heads=H, is_ghost=True, activation_level=0.25)
    )
    ref2 = reference_forward(x, params, num_heads=H, is_ghost=True, activation_level=0.25)
    assert jnp.allclose(out2, ref2, atol=2e-2, rtol=2e-2)

    print("KERNEL_OK")
</pallas_src>

<mosaic_0001>
module attributes {stable_mosaic.version = 11 : i64} {
  func.func @expert_block_kernel(%arg0: i32, %arg1: i32, %arg2: memref<1xf32, #tpu.memory_space<smem>>, %arg3: memref<1x8x32xf32, #tpu.memory_space<vmem>>, %arg4: memref<1x32xf32, #tpu.memory_space<vmem>>, %arg5: memref<1x32xf32, #tpu.memory_space<vmem>>, %arg6: memref<32x32xbf16, #tpu.memory_space<vmem>>, %arg7: memref<32x32xbf16, #tpu.memory_space<vmem>>, %arg8: memref<32x32xbf16, #tpu.memory_space<vmem>>, %arg9: memref<1x32xf32, #tpu.memory_space<vmem>>, %arg10: memref<1x32xf32, #tpu.memory_space<vmem>>, %arg11: memref<1x32xf32, #tpu.memory_space<vmem>>, %arg12: memref<32x32xbf16, #tpu.memory_space<vmem>>, %arg13: memref<1x32xf32, #tpu.memory_space<vmem>>, %arg14: memref<1x32xf32, #tpu.memory_space<vmem>>, %arg15: memref<1x32xf32, #tpu.memory_space<vmem>>, %arg16: memref<32x128xbf16, #tpu.memory_space<vmem>>, %arg17: memref<1x128xf32, #tpu.memory_space<vmem>>, %arg18: memref<128x32xbf16, #tpu.memory_space<vmem>>, %arg19: memref<1x32xf32, #tpu.memory_space<vmem>>, %arg20: memref<1x8x32xf32, #tpu.memory_space<vmem>>, %arg21: memref<4x8x8xbf16, #tpu.memory_space<vmem>>, %arg22: memref<4x8x8xbf16, #tpu.memory_space<vmem>>) attributes {dimension_semantics = [#tpu.dimension_semantics<parallel>, #tpu.dimension_semantics<arbitrary>], iteration_bounds = array<i64: 2, 1>, scalar_prefetch = 0 : i64, scratch_operands = 2 : i64, tpu.core_type = #tpu.core_type<tc>, window_params = [{transform_indices = @transform_0, window_bounds = array<i64: 1>}, {transform_indices = @transform_1, window_bounds = array<i64: 1, 8, 32>}, {pipeline_mode = #tpu.pipeline_mode<synchronous>, transform_indices = @transform_2, window_bounds = array<i64: 1, 32>}, {pipeline_mode = #tpu.pipeline_mode<synchronous>, transform_indices = @transform_3, window_bounds = array<i64: 1, 32>}, {pipeline_mode = #tpu.pipeline_mode<synchronous>, transform_indices = @transform_4, window_bounds = array<i64: 32, 32>}, {pipeline_mode = #tpu.pipeline_mode<synchronous>, transform_indices = @transform_5, window_bounds = array<i64: 32, 32>}, {pipeline_mode = #tpu.pipeline_mode<synchronous>, transform_indices = @transform_6, window_bounds = array<i64: 32, 32>}, {pipeline_mode = #tpu.pipeline_mode<synchronous>, transform_indices = @transform_7, window_bounds = array<i64: 1, 32>}, {pipeline_mode = #tpu.pipeline_mode<synchronous>, transform_indices = @transform_8, window_bounds = array<i64: 1, 32>}, {pipeline_mode = #tpu.pipeline_mode<synchronous>, transform_indices = @transform_9, window_bounds = array<i64: 1, 32>}, {pipeline_mode = #tpu.pipeline_mode<synchronous>, transform_indices = @transform_10, window_bounds = array<i64: 32, 32>}, {pipeline_mode = #tpu.pipeline_mode<synchronous>, transform_indices = @transform_11, window_bounds = array<i64: 1, 32>}, {pipeline_mode = #tpu.pipeline_mode<synchronous>, transform_indices = @transform_12, window_bounds = array<i64: 1, 32>}, {pipeline_mode = #tpu.pipeline_mode<synchronous>, transform_indices = @transform_13, window_bounds = array<i64: 1, 32>}, {pipeline_mode = #tpu.pipeline_mode<synchronous>, transform_indices = @transform_14, window_bounds = array<i64: 32, 128>}, {pipeline_mode = #tpu.pipeline_mode<synchronous>, transform_indices = @transform_15, window_bounds = array<i64: 1, 128>}, {pipeline_mode = #tpu.pipeline_mode<synchronous>, transform_indices = @transform_16, window_bounds = array<i64: 128, 32>}, {pipeline_mode = #tpu.pipeline_mode<synchronous>, transform_indices = @transform_17, window_bounds = array<i64: 1, 32>}, {transform_indices = @transform_18, window_bounds = array<i64: 1, 8, 32>}]} {
    %c0_i32 = arith.constant 0 : i32
    %0 = arith.cmpi eq, %arg1, %c0_i32 : i32
    %1 = arith.extui %0 : i1 to i32
    %c0_i32_0 = arith.constant 0 : i32
    %2 = arith.cmpi ne, %1, %c0_i32_0 : i32
    scf.if %2 {
      %c0_56 = arith.constant 0 : index
      %c0_57 = arith.constant 0 : index
      %c0_58 = arith.constant 0 : index
      %116 = vector.load %arg3[%c0_56, %c0_57, %c0_58] : memref<1x8x32xf32, #tpu.memory_space<vmem>>, vector<1x8x32xf32>
      %117 = vector.shape_cast %116 : vector<1x8x32xf32> to vector<8x32xf32>
      %c0_59 = arith.constant 0 : index
      %c0_60 = arith.constant 0 : index
      %118 = vector.load %arg4[%c0_59, %c0_60] : memref<1x32xf32, #tpu.memory_space<vmem>>, vector<1x32xf32>
      %c0_61 = arith.constant 0 : index
      %c0_62 = arith.constant 0 : index
      %119 = vector.load %arg5[%c0_61, %c0_62] : memref<1x32xf32, #tpu.memory_space<vmem>>, vector<1x32xf32>
      %cst_63 = arith.constant dense<0.000000e+00> : vector<8xf32>
      %120 = vector.multi_reduction <add>, %117, %cst_63 [1] : vector<8x32xf32> to vector<8xf32>
      %121 = vector.shape_cast %120 : vector<8xf32> to vector<8x1xf32>
      %cst_64 = arith.constant 3.200000e+01 : f32
      %122 = vector.broadcast %cst_64 : f32 to vector<8x1xf32>
      %123 = arith.divf %121, %122 : vector<8x1xf32>
      %124 = vector.broadcast %123 : vector<8x1xf32> to vector<8x32xf32>
      %125 = arith.subf %117, %124 : vector<8x32xf32>
      %126 = arith.mulf %125, %125 : vector<8x32xf32>
      %cst_65 = arith.constant dense<0.000000e+00> : vector<8xf32>
      %127 = vector.multi_reduction <add>, %126, %cst_65 [1] : vector<8x32xf32> to vector<8xf32>
      %128 = vector.shape_cast %127 : vector<8xf32> to vector<8x1xf32>
      %cst_66 = arith.constant 3.200000e+01 : f32
      %129 = vector.broadcast %cst_66 : f32 to vector<8x1xf32>
      %130 = arith.divf %128, %129 : vector<8x1xf32>
      %131 = vector.broadcast %123 : vector<8x1xf32> to vector<8x32xf32>
      %132 = arith.subf %117, %131 : vector<8x32xf32>
      %cst_67 = arith.constant 9.99999974E-6 : f32
      %133 = vector.broadcast %cst_67 : f32 to vector<8x1xf32>
      %134 = arith.addf %130, %133 : vector<8x1xf32>
      %135 = math.rsqrt %134 : vector<8x1xf32>
      %136 = vector.broadcast %135 : vector<8x1xf32> to vector<8x32xf32>
      %137 = arith.mulf %132, %136 : vector<8x32xf32>
      %138 = vector.broadcast %118 : vector<1x32xf32> to vector<8x32xf32>
      %139 = arith.mulf %137, %138 : vector<8x32xf32>
      %140 = vector.broadcast %119 : vector<1x32xf32> to vector<8x32xf32>
      %141 = arith.addf %139, %140 : vector<8x32xf32>
      %142 = arith.truncf %141 : vector<8x32xf32> to vector<8x32xbf16>
      %c0_68 = arith.constant 0 : index
      %c0_69 = arith.constant 0 : index
      %143 = vector.load %arg7[%c0_68, %c0_69] : memref<32x32xbf16, #tpu.memory_space<vmem>>, vector<32x32xbf16>
      %cst_70 = arith.constant dense<0.000000e+00> : vector<8x32xf32>
      %144 = tpu.matmul %142, %143, %cst_70 {dimension_numbers = #tpu.dot_dimension_numbers<[1], [0], [0], [1], [0, 0, 1, 1], [], []>} : vector<8x32xbf16>, vector<32x32xbf16>, vector<8x32xf32> -> vector<8x32xf32>
      %c0_71 = arith.constant 0 : index
      %c0_72 = arith.constant 0 : index
      %145 = vector.load %arg10[%c0_71, %c0_72] : memref<1x32xf32, #tpu.memory_space<vmem>>, vector<1x32xf32>
      %146 = vector.broadcast %145 : vector<1x32xf32> to vector<8x32xf32>
      %147 = arith.addf %144, %146 : vector<8x32xf32>
      %c0_73 = arith.constant 0 : index
      %c0_74 = arith.constant 0 : index
      %148 = vector.load %arg8[%c0_73, %c0_74] : memref<32x32xbf16, #tpu.memory_space<vmem>>, vector<32x32xbf16>
      %cst_75 = arith.constant dense<0.000000e+00> : vector<8x32xf32>
      %149 = tpu.matmul %142, %148, %cst_75 {dimension_numbers = #tpu.dot_dimension_numbers<[1], [0], [0], [1], [0, 0, 1, 1], [], []>} : vector<8x32xbf16>, vector<32x32xbf16>, vector<8x32xf32> -> vector<8x32xf32>
      %c0_76 = arith.constant 0 : index
      %c0_77 = arith.constant 0 : index
      %150 = vector.load %arg11[%c0_76, %c0_77] : memref<1x32xf32, #tpu.memory_space<vmem>>, vector<1x32xf32>
      %151 = vector.broadcast %150 : vector<1x32xf32> to vector<8x32xf32>
      %152 = arith.addf %149, %151 : vector<8x32xf32>
      %153 = vector.shape_cast %147 : vector<8x32xf32> to vector<8x4x8xf32>
      %154 = tpu.transpose %153, [1, 0, 2] : vector<8x4x8xf32> -> vector<4x8x8xf32>
      %155 = arith.truncf %154 : vector<4x8x8xf32> to vector<4x8x8xbf16>
      %c0_78 = arith.constant 0 : index
      %c0_79 = arith.constant 0 : index
      %c0_80 = arith.constant 0 : index
      %156 = vector.load %arg21[%c0_78, %c0_79, %c0_80] : memref<4x8x8xbf16, #tpu.memory_space<vmem>>, vector<4x8x8xbf16>
      tpu.vector_store %arg21[%c0_78, %c0_79, %c0_80], %155 {strides = array<i32>} : memref<4x8x8xbf16, #tpu.memory_space<vmem>>, vector<4x8x8xbf16>,
      %157 = vector.shape_cast %152 : vector<8x32xf32> to vector<8x4x8xf32>
      %158 = tpu.transpose %157, [1, 0, 2] : vector<8x4x8xf32> -> vector<4x8x8xf32>
      %159 = arith.truncf %158 : vector<4x8x8xf32> to vector<4x8x8xbf16>
      %c0_81 = arith.constant 0 : index
      %c0_82 = arith.constant 0 : index
      %c0_83 = arith.constant 0 : index
      %160 = vector.load %arg22[%c0_81, %c0_82, %c0_83] : memref<4x8x8xbf16, #tpu.memory_space<vmem>>, vector<4x8x8xbf16>
      tpu.vector_store %arg22[%c0_81, %c0_82, %c0_83], %159 {strides = array<i32>} : memref<4x8x8xbf16, #tpu.memory_space<vmem>>, vector<4x8x8xbf16>,
    } else {
    }
    %c8_i32 = arith.constant 8 : i32
    %3 = arith.muli %arg1, %c8_i32 : i32
    %4 = tpu.assume_multiple %3, 8 : i32
    %c0 = arith.constant 0 : index
    %5 = arith.index_cast %4 : i32 to index
    %c0_1 = arith.constant 0 : index
    %6 = vector.load %arg3[%c0, %5, %c0_1] : memref<1x8x32xf32, #tpu.memory_space<vmem>>, vector<1x8x32xf32>
    %7 = vector.shape_cast %6 : vector<1x8x32xf32> to vector<8x32xf32>
    %c0_2 = arith.constant 0 : index
    %c0_3 = arith.constant 0 : index
    %8 = vector.load %arg4[%c0_2, %c0_3] : memref<1x32xf32, #tpu.memory_space<vmem>>, vector<1x32xf32>
    %c0_4 = arith.constant 0 : index
    %c0_5 = arith.constant 0 : index
    %9 = vector.load %arg5[%c0_4, %c0_5] : memref<1x32xf32, #tpu.memory_space<vmem>>, vector<1x32xf32>
    %cst = arith.constant dense<0.000000e+00> : vector<8xf32>
    %10 = vector.multi_reduction <add>, %7, %cst [1] : vector<8x32xf32> to vector<8xf32>
    %11 = vector.shape_cast %10 : vector<8xf32> to vector<8x1xf32>
    %cst_6 = arith.constant 3.200000e+01 : f32
    %12 = vector.broadcast %cst_6 : f32 to vector<8x1xf32>
    %13 = arith.divf %11, %12 : vector<8x1xf32>
    %14 = vector.broadcast %13 : vector<8x1xf32> to vector<8x32xf32>
    %15 = arith.subf %7, %14 : vector<8x32xf32>
    %16 = arith.mulf %15, %15 : vector<8x32xf32>
    %cst_7 = arith.constant dense<0.000000e+00> : vector<8xf32>
    %17 = vector.multi_reduction <add>, %16, %cst_7 [1] : vector<8x32xf32> to vector<8xf32>
    %18 = vector.shape_cast %17 : vector<8xf32> to vector<8x1xf32>
    %cst_8 = arith.constant 3.200000e+01 : f32
    %19 = vector.broadcast %cst_8 : f32 to vector<8x1xf32>
    %20 = arith.divf %18, %19 : vector<8x1xf32>
    %21 = vector.broadcast %13 : vector<8x1xf32> to vector<8x32xf32>
    %22 = arith.subf %7, %21 : vector<8x32xf32>
    %cst_9 = arith.constant 9.99999974E-6 : f32
    %23 = vector.broadcast %cst_9 : f32 to vector<8x1xf32>
    %24 = arith.addf %20, %23 : vector<8x1xf32>
    %25 = math.rsqrt %24 : vector<8x1xf32>
    %26 = vector.broadcast %25 : vector<8x1xf32> to vector<8x32xf32>
    %27 = arith.mulf %22, %26 : vector<8x32xf32>
    %28 = vector.broadcast %8 : vector<1x32xf32> to vector<8x32xf32>
    %29 = arith.mulf %27, %28 : vector<8x32xf32>
    %30 = vector.broadcast %9 : vector<1x32xf32> to vector<8x32xf32>
    %31 = arith.addf %29, %30 : vector<8x32xf32>
    %32 = arith.truncf %31 : vector<8x32xf32> to vector<8x32xbf16>
    %c0_10 = arith.constant 0 : index
    %c0_11 = arith.constant 0 : index
    %33 = vector.load %arg6[%c0_10, %c0_11] : memref<32x32xbf16, #tpu.memory_space<vmem>>, vector<32x32xbf16>
    %cst_12 = arith.constant dense<0.000000e+00> : vector<8x32xf32>
    %34 = tpu.matmul %32, %33, %cst_12 {dimension_numbers = #tpu.dot_dimension_numbers<[1], [0], [0], [1], [0, 0, 1, 1], [], []>} : vector<8x32xbf16>, vector<32x32xbf16>, vector<8x32xf32> -> vector<8x32xf32>
    %c0_13 = arith.constant 0 : index
    %c0_14 = arith.constant 0 : index
    %35 = vector.load %arg9[%c0_13, %c0_14] : memref<1x32xf32, #tpu.memory_space<vmem>>, vector<1x32xf32>
    %36 = vector.broadcast %35 : vector<1x32xf32> to vector<8x32xf32>
    %37 = arith.addf %34, %36 : vector<8x32xf32>
    %38 = vector.shape_cast %37 : vector<8x32xf32> to vector<8x4x8xf32>
    %39 = tpu.transpose %38, [1, 0, 2] : vector<8x4x8xf32> -> vector<4x8x8xf32>
    %40 = arith.truncf %39 : vector<4x8x8xf32> to vector<4x8x8xbf16>
    %c0_15 = arith.constant 0 : index
    %c0_16 = arith.constant 0 : index
    %c0_17 = arith.constant 0 : index
    %41 = vector.load %arg21[%c0_15, %c0_16, %c0_17] : memref<4x8x8xbf16, #tpu.memory_space<vmem>>, vector<4x8x8xbf16>
    "tpu.trace_start"() <{level = 10 : i32, message = "hqd,hkd->hqk"}> : () -> ()
    %cst_18 = arith.constant dense<0.000000e+00> : vector<4x8x8xf32>
    %42 = tpu.matmul %40, %41, %cst_18 {dimension_numbers = #tpu.dot_dimension_numbers<[2], [2], [1], [1], [0, 0, 0, 1, 1, 1], [0], [0]>} : vector<4x8x8xbf16>, vector<4x8x8xbf16>, vector<4x8x8xf32> -> vector<4x8x8xf32>
    "tpu.trace_stop"() : () -> ()
    %cst_19 = arith.constant dense<0xFF800000> : vector<4x8xf32>
    %43 = vector.multi_reduction <maximumf>, %42, %cst_19 [2] : vector<4x8x8xf32> to vector<4x8xf32>
    %44 = vector.shape_cast %43 : vector<4x8xf32> to vector<4x8x1xf32>
    %45 = vector.broadcast %44 : vector<4x8x1xf32> to vector<4x8x8xf32>
    %46 = arith.subf %42, %45 : vector<4x8x8xf32>
    %47 = math.exp2 %46 : vector<4x8x8xf32>
    %cst_20 = arith.constant dense<0.000000e+00> : vector<4x8xf32>
    %48 = vector.multi_reduction <add>, %47, %cst_20 [2] : vector<4x8x8xf32> to vector<4x8xf32>
    %49 = vector.shape_cast %48 : vector<4x8xf32> to vector<4x8x1xf32>
    %50 = arith.truncf %47 : vector<4x8x8xf32> to vector<4x8x8xbf16>
    %c0_21 = arith.constant 0 : index
    %c0_22 = arith.constant 0 : index
    %c0_23 = arith.constant 0 : index
    %51 = vector.load %arg22[%c0_21, %c0_22, %c0_23] : memref<4x8x8xbf16, #tpu.memory_space<vmem>>, vector<4x8x8xbf16>
    "tpu.trace_start"() <{level = 10 : i32, message = "hqk,hkd->hqd"}> : () -> ()
    %cst_24 = arith.constant dense<0.000000e+00> : vector<4x8x8xf32>
    %52 = tpu.matmul %50, %51, %cst_24 {dimension_numbers = #tpu.dot_dimension_numbers<[2], [1], [1], [2], [0, 0, 0, 1, 1, 2], [0], [0]>} : vector<4x8x8xbf16>, vector<4x8x8xbf16>, vector<4x8x8xf32> -> vector<4x8x8xf32>
    "tpu.trace_stop"() : () -> ()
    %53 = tpu.reciprocal %49 {approx = true} : vector<4x8x1xf32> -> vector<4x8x1xf32>
    %54 = vector.broadcast %53 : vector<4x8x1xf32> to vector<4x8x8xf32>
    %55 = arith.mulf %52, %54 : vector<4x8x8xf32>
    %56 = tpu.transpose %55, [1, 0, 2] : vector<4x8x8xf32> -> vector<8x4x8xf32>
    %57 = vector.shape_cast %56 : vector<8x4x8xf32> to vector<8x32xf32>
    %58 = arith.truncf %57 : vector<8x32xf32> to vector<8x32xbf16>
    %c0_25 = arith.constant 0 : index
    %c0_26 = arith.constant 0 : index
    %59 = vector.load %arg12[%c0_25, %c0_26] : memref<32x32xbf16, #tpu.memory_space<vmem>>, vector<32x32xbf16>
    %cst_27 = arith.constant dense<0.000000e+00> : vector<8x32xf32>
    %60 = tpu.matmul %58, %59, %cst_27 {dimension_numbers = #tpu.dot_dimension_numbers<[1], [0], [0], [1], [0, 0, 1, 1], [], []>} : vector<8x32xbf16>, vector<32x32xbf16>, vector<8x32xf32> -> vector<8x32xf32>
    %c0_28 = arith.constant 0 : index
    %c0_29 = arith.constant 0 : index
    %61 = vector.load %arg13[%c0_28, %c0_29] : memref<1x32xf32, #tpu.memory_space<vmem>>, vector<1x32xf32>
    %62 = vector.broadcast %61 : vector<1x32xf32> to vector<8x32xf32>
    %63 = arith.addf %60, %62 : vector<8x32xf32>
    %64 = arith.addf %7, %63 : vector<8x32xf32>
    %c0_30 = arith.constant 0 : index
    %c0_31 = arith.constant 0 : index
    %65 = vector.load %arg14[%c0_30, %c0_31] : memref<1x32xf32, #tpu.memory_space<vmem>>, vector<1x32xf32>
    %c0_32 = arith.constant 0 : index
    %c0_33 = arith.constant 0 : index
    %66 = vector.load %arg15[%c0_32, %c0_33] : memref<1x32xf32, #tpu.memory_space<vmem>>, vector<1x32xf32>
    %cst_34 = arith.constant dense<0.000000e+00> : vector<8xf32>
    %67 = vector.multi_reduction <add>, %64, %cst_34 [1] : vector<8x32xf32> to vector<8xf32>
    %68 = vector.shape_cast %67 : vector<8xf32> to vector<8x1xf32>
    %cst_35 = arith.constant 3.200000e+01 : f32
    %69 = vector.broadcast %cst_35 : f32 to vector<8x1xf32>
    %70 = arith.divf %68, %69 : vector<8x1xf32>
    %71 = vector.broadcast %70 : vector<8x1xf32> to vector<8x32xf32>
    %72 = arith.subf %64, %71 : vector<8x32xf32>
    %73 = arith.mulf %72, %72 : vector<8x32xf32>
    %cst_36 = arith.constant dense<0.000000e+00> : vector<8xf32>
    %74 = vector.multi_reduction <add>, %73, %cst_36 [1] : vector<8x32xf32> to vector<8xf32>
    %75 = vector.shape_cast %74 : vector<8xf32> to vector<8x1xf32>
    %cst_37 = arith.constant 3.200000e+01 : f32
    %76 = vector.broadcast %cst_37 : f32 to vector<8x1xf32>
    %77 = arith.divf %75, %76 : vector<8x1xf32>
    %78 = vector.broadcast %70 : vector<8x1xf32> to vector<8x32xf32>
    %79 = arith.subf %64, %78 : vector<8x32xf32>
    %cst_38 = arith.constant 9.99999974E-6 : f32
    %80 = vector.broadcast %cst_38 : f32 to vector<8x1xf32>
    %81 = arith.addf %77, %80 : vector<8x1xf32>
    %82 = math.rsqrt %81 : vector<8x1xf32>
    %83 = vector.broadcast %82 : vector<8x1xf32> to vector<8x32xf32>
    %84 = arith.mulf %79, %83 : vector<8x32xf32>
    %85 = vector.broadcast %65 : vector<1x32xf32> to vector<8x32xf32>
    %86 = arith.mulf %84, %85 : vector<8x32xf32>
    %87 = vector.broadcast %66 : vector<1x32xf32> to vector<8x32xf32>
    %88 = arith.addf %86, %87 : vector<8x32xf32>
    %89 = arith.truncf %88 : vector<8x32xf32> to vector<8x32xbf16>
    %c0_39 = arith.constant 0 : index
    %c0_40 = arith.constant 0 : index
    %90 = vector.load %arg16[%c0_39, %c0_40] : memref<32x128xbf16, #tpu.memory_space<vmem>>, vector<32x128xbf16>
    %cst_41 = arith.constant dense<0.000000e+00> : vector<8x128xf32>
    %91 = tpu.matmul %89, %90, %cst_41 {dimension_numbers = #tpu.dot_dimension_numbers<[1], [0], [0], [1], [0, 0, 1, 1], [], []>} : vector<8x32xbf16>, vector<32x128xbf16>, vector<8x128xf32> -> vector<8x128xf32>
    %c0_42 = arith.constant 0 : index
    %c0_43 = arith.constant 0 : index
    %92 = vector.load %arg17[%c0_42, %c0_43] : memref<1x128xf32, #tpu.memory_space<vmem>>, vector<1x128xf32>
    %93 = vector.broadcast %92 : vector<1x128xf32> to vector<8x128xf32>
    %94 = arith.addf %91, %93 : vector<8x128xf32>
    %cst_44 = arith.constant 5.000000e-01 : f32
    %95 = vector.broadcast %cst_44 : f32 to vector<8x128xf32>
    %96 = arith.mulf %95, %94 : vector<8x128xf32>
    %cst_45 = arith.constant 0.707106769 : f32
    %97 = vector.broadcast %cst_45 : f32 to vector<8x128xf32>
    %98 = arith.mulf %94, %97 : vector<8x128xf32>
    %99 = math.erf %98 : vector<8x128xf32>
    %cst_46 = arith.constant 1.000000e+00 : f32
    %100 = vector.broadcast %cst_46 : f32 to vector<8x128xf32>
    %101 = arith.addf %100, %99 : vector<8x128xf32>
    %102 = arith.mulf %96, %101 : vector<8x128xf32>
    %103 = arith.truncf %102 : vector<8x128xf32> to vector<8x128xbf16>
    %c0_47 = arith.constant 0 : index
    %c0_48 = arith.constant 0 : index
    %104 = vector.load %arg18[%c0_47, %c0_48] : memref<128x32xbf16, #tpu.memory_space<vmem>>, vector<128x32xbf16>
    %cst_49 = arith.constant dense<0.000000e+00> : vector<8x32xf32>
    %105 = tpu.matmul %103, %104, %cst_49 {dimension_numbers = #tpu.dot_dimension_numbers<[1], [0], [0], [1], [0, 0, 1, 1], [], []>} : vector<8x128xbf16>, vector<128x32xbf16>, vector<8x32xf32> -> vector<8x32xf32>
    %c0_50 = arith.constant 0 : index
    %c0_51 = arith.constant 0 : index
    %106 = vector.load %arg19[%c0_50, %c0_51] : memref<1x32xf32, #tpu.memory_space<vmem>>, vector<1x32xf32>
    %107 = vector.broadcast %106 : vector<1x32xf32> to vector<8x32xf32>
    %108 = arith.addf %105, %107 : vector<8x32xf32>
    %109 = arith.addf %64, %108 : vector<8x32xf32>
    %c0_52 = arith.constant 0 : index
    %110 = memref.load %arg2[%c0_52] : memref<1xf32, #tpu.memory_space<smem>>
    %111 = vector.broadcast %110 : f32 to vector<8x32xf32>
    %112 = arith.mulf %109, %111 : vector<8x32xf32>
    %c0_53 = arith.constant 0 : index
    %c0_54 = arith.constant 0 : index
    %c0_55 = arith.constant 0 : index
    %113 = vector.load %arg20[%c0_53, %c0_54, %c0_55] : memref<1x8x32xf32, #tpu.memory_space<vmem>>, vector<1x8x32xf32>
    %114 = vector.shape_cast %113 : vector<1x8x32xf32> to vector<8x32xf32>
    %115 = vector.shape_cast %112 : vector<8x32xf32> to vector<1x8x32xf32>
    tpu.vector_store %arg20[%c0_53, %c0_54, %c0_55], %115 {strides = array<i32>} : memref<1x8x32xf32, #tpu.memory_space<vmem>>, vector<1x8x32xf32>,
    return
  }
  func.func @transform_0(%arg0: i32, %arg1: i32) -> i32 {
    %c0_i32 = arith.constant 0 : i32
    %c0_i32_0 = arith.constant 0 : i32
    return %c0_i32 : i32
  }
  func.func @transform_1(%arg0: i32, %arg1: i32) -> (i32, i32, i32) {
    %c0_i32 = arith.constant 0 : i32
    %c0_i32_0 = arith.constant 0 : i32
    %c0_i32_1 = arith.constant 0 : i32
    return %arg0, %c0_i32, %c0_i32_0 : i32, i32, i32
  }
  func.func @transform_2(%arg0: i32, %arg1: i32) -> (i32, i32) {
    %c0_i32 = arith.constant 0 : i32
    %c0_i32_0 = arith.constant 0 : i32
    %c0_i32_1 = arith.constant 0 : i32
    return %c0_i32, %c0_i32_0 : i32, i32
  }
  func.func @transform_3(%arg0: i32, %arg1: i32) -> (i32, i32) {
    %c0_i32 = arith.constant 0 : i32
    %c0_i32_0 = arith.constant 0 : i32
    %c0_i32_1 = arith.constant 0 : i32
    return %c0_i32, %c0_i32_0 : i32, i32
  }
  func.func @transform_4(%arg0: i32, %arg1: i32) -> (i32, i32) {
    %c0_i32 = arith.constant 0 : i32
    %c0_i32_0 = arith.constant 0 : i32
    %c0_i32_1 = arith.constant 0 : i32
    return %c0_i32, %c0_i32_0 : i32, i32
  }
  func.func @transform_5(%arg0: i32, %arg1: i32) -> (i32, i32) {
    %c0_i32 = arith.constant 0 : i32
    %c0_i32_0 = arith.constant 0 : i32
    %c0_i32_1 = arith.constant 0 : i32
    return %c0_i32, %c0_i32_0 : i32, i32
  }
  func.func @transform_6(%arg0: i32, %arg1: i32) -> (i32, i32) {
    %c0_i32 = arith.constant 0 : i32
    %c0_i32_0 = arith.constant 0 : i32
    %c0_i32_1 = arith.constant 0 : i32
    return %c0_i32, %c0_i32_0 : i32, i32
  }
  func.func @transform_7(%arg0: i32, %arg1: i32) -> (i32, i32) {
    %c0_i32 = arith.constant 0 : i32
    %c0_i32_0 = arith.constant 0 : i32
    %c0_i32_1 = arith.constant 0 : i32
    return %c0_i32, %c0_i32_0 : i32, i32
  }
  func.func @transform_8(%arg0: i32, %arg1: i32) -> (i32, i32) {
    %c0_i32 = arith.constant 0 : i32
    %c0_i32_0 = arith.constant 0 : i32
    %c0_i32_1 = arith.constant 0 : i32
    return %c0_i32, %c0_i32_0 : i32, i32
  }
  func.func @transform_9(%arg0: i32, %arg1: i32) -> (i32, i32) {
    %c0_i32 = arith.constant 0 : i32
    %c0_i32_0 = arith.constant 0 : i32
    %c0_i32_1 = arith.constant 0 : i32
    return %c0_i32, %c0_i32_0 : i32, i32
  }
  func.func @transform_10(%arg0: i32, %arg1: i32) -> (i32, i32) {
    %c0_i32 = arith.constant 0 : i32
    %c0_i32_0 = arith.constant 0 : i32
    %c0_i32_1 = arith.constant 0 : i32
    return %c0_i32, %c0_i32_0 : i32, i32
  }
  func.func @transform_11(%arg0: i32, %arg1: i32) -> (i32, i32) {
    %c0_i32 = arith.constant 0 : i32
    %c0_i32_0 = arith.constant 0 : i32
    %c0_i32_1 = arith.constant 0 : i32
    return %c0_i32, %c0_i32_0 : i32, i32
  }
  func.func @transform_12(%arg0: i32, %arg1: i32) -> (i32, i32) {
    %c0_i32 = arith.constant 0 : i32
    %c0_i32_0 = arith.constant 0 : i32
    %c0_i32_1 = arith.constant 0 : i32
    return %c0_i32, %c0_i32_0 : i32, i32
  }
  func.func @transform_13(%arg0: i32, %arg1: i32) -> (i32, i32) {
    %c0_i32 = arith.constant 0 : i32
    %c0_i32_0 = arith.constant 0 : i32
    %c0_i32_1 = arith.constant 0 : i32
    return %c0_i32, %c0_i32_0 : i32, i32
  }
  func.func @transform_14(%arg0: i32, %arg1: i32) -> (i32, i32) {
    %c0_i32 = arith.constant 0 : i32
    %c0_i32_0 = arith.constant 0 : i32
    %c0_i32_1 = arith.constant 0 : i32
    return %c0_i32, %c0_i32_0 : i32, i32
  }
  func.func @transform_15(%arg0: i32, %arg1: i32) -> (i32, i32) {
    %c0_i32 = arith.constant 0 : i32
    %c0_i32_0 = arith.constant 0 : i32
    %c0_i32_1 = arith.constant 0 : i32
    return %c0_i32, %c0_i32_0 : i32, i32
  }
  func.func @transform_16(%arg0: i32, %arg1: i32) -> (i32, i32) {
    %c0_i32 = arith.constant 0 : i32
    %c0_i32_0 = arith.constant 0 : i32
    %c0_i32_1 = arith.constant 0 : i32
    return %c0_i32, %c0_i32_0 : i32, i32
  }
  func.func @transform_17(%arg0: i32, %arg1: i32) -> (i32, i32) {
    %c0_i32 = arith.constant 0 : i32
    %c0_i32_0 = arith.constant 0 : i32
    %c0_i32_1 = arith.constant 0 : i32
    return %c0_i32, %c0_i32_0 : i32, i32
  }
  func.func @transform_18(%arg0: i32, %arg1: i32) -> (i32, i32, i32) {
    %c0_i32 = arith.constant 0 : i32
    %c0_i32_0 = arith.constant 0 : i32
    return %arg0, %arg1, %c0_i32 : i32, i32, i32
  }
}

</mosaic_0001>

<llo_original>
// kernel: tpu_custom_call.1
$region0: #{tpu_custom_call.1}
  #allocation0 [shape = 'u32[]', space=smem, size = 0x4, offset = 0x4, fixed_abs, tag = 'smem constant byte address 0x4 - core index']
  #allocation1 [shape = 'u32[72,128]{1,0:T(1,128)}', space=vmem, size = 0x9000, scoped, tag = 'internal scratch']
  #allocation2 [shape = 'bf16[4,8,8]{2,1,0:T(8,128)(2,1)}', space=vmem, size = 0x2000, scoped, tag = 'scratch operand']
  #allocation3 [shape = 'bf16[4,8,8]{2,1,0:T(8,128)(2,1)}', space=vmem, size = 0x2000, scoped, tag = 'scratch operand']
  #allocation4 [shape = 'f32[1]{0:T(128)S(6)}', space=smem, size = 0x200, scoped, tag = 'scoped memory for tpu_custom_call.1']
  %s0 = inlined_call_operand.<no memory space> [shape: f32[1], index: 0, kind: input, shape index: {}]
  %s1 = inlined_call_operand.vmem [shape: f32[2,8,32], index: 1, kind: input, shape index: {}]
  %s2 = inlined_call_operand.hbm [shape: f32[1,32], index: 2, kind: input, shape index: {}]
  %s3 = inlined_call_operand.hbm [shape: f32[1,32], index: 3, kind: input, shape index: {}]
  %s4 = inlined_call_operand.vmem [shape: bf16[32,32], index: 4, kind: input, shape index: {}]
  %s5 = inlined_call_operand.vmem [shape: bf16[32,32], index: 5, kind: input, shape index: {}]
  %s6 = inlined_call_operand.vmem [shape: bf16[32,32], index: 6, kind: input, shape index: {}]
  %s7 = inlined_call_operand.hbm [shape: f32[1,32], index: 7, kind: input, shape index: {}]
  %s8 = inlined_call_operand.hbm [shape: f32[1,32], index: 8, kind: input, shape index: {}]
  %s9 = inlined_call_operand.hbm [shape: f32[1,32], index: 9, kind: input, shape index: {}]
  %s10 = inlined_call_operand.vmem [shape: bf16[32,32], index: 10, kind: input, shape index: {}]
  %s11 = inlined_call_operand.hbm [shape: f32[1,32], index: 11, kind: input, shape index: {}]
  %s12 = inlined_call_operand.hbm [shape: f32[1,32], index: 12, kind: input, shape index: {}]
  %s13 = inlined_call_operand.hbm [shape: f32[1,32], index: 13, kind: input, shape index: {}]
  %s14 = inlined_call_operand.hbm [shape: bf16[32,128], index: 14, kind: input, shape index: {}]
  %s15 = inlined_call_operand.hbm [shape: f32[1,128], index: 15, kind: input, shape index: {}]
  %s16 = inlined_call_operand.vmem [shape: bf16[128,32], index: 16, kind: input, shape index: {}]
  %s17 = inlined_call_operand.vmem [shape: f32[1,32], index: 17, kind: input, shape index: {}]
  %s18 = inlined_call_operand.hbm [shape: f32[2,8,32], index: 18, kind: output, shape index: {}]
  %s19 = sld [smem:[#allocation0]]
  $region149: #{tpu_custom_call.1} parent=0
    _
  %s21 = ssub.s32 1, %s19
  %s22 = scalar_select 0, %s21, %s19
  %23 = sst [smem:[#allocation4]] %s0
  $region1: #{tpu_custom_call.1} parent=0
    #allocation5 [shape = 'u8[512]{0}', space=vmem, size = 0x400, scoped, tag = 'input window, operand 2, single buffered']
    #allocation6 [shape = 's32[2]{0}', space=sflag, size = 0x8, scoped, tag = 'scoped memory for tpu_custom_call.1']
    #allocation7 [shape = 's32[2]{0}', space=sflag, size = 0x8, scoped, tag = 'scoped memory for tpu_custom_call.1']
    #allocation8 [shape = 'u8[512]{0}', space=vmem, size = 0x400, scoped, tag = 'input window, operand 3, single buffered']
    #allocation9 [shape = 's32[1]{0}', space=sflag, size = 0x4, scoped, tag = 'scoped memory for tpu_custom_call.1']
    #allocation10 [shape = 'u8[512]{0}', space=vmem, size = 0x400, scoped, tag = 'input window, operand 7, single buffered']
    #allocation11 [shape = 'u8[512]{0}', space=vmem, size = 0x400, scoped, tag = 'input window, operand 8, single buffered']
    #allocation12 [shape = 's32[1]{0}', space=sflag, size = 0x4, scoped, tag = 'scoped memory for tpu_custom_call.1']
    #allocation13 [shape = 'u8[512]{0}', space=vmem, size = 0x400, scoped, tag = 'input window, operand 9, single buffered']
    #allocation14 [shape = 'u8[512]{0}', space=vmem, size = 0x400, scoped, tag = 'input window, operand 11, single buffered']
    #allocation15 [shape = 's32[1]{0}', space=sflag, size = 0x4, scoped, tag = 'scoped memory for tpu_custom_call.1']
    #allocation16 [shape = 'u8[512]{0}', space=vmem, size = 0x400, scoped, tag = 'input window, operand 12, single buffered']
    #allocation17 [shape = 'u8[512]{0}', space=vmem, size = 0x400, scoped, tag = 'input window, operand 13, single buffered']
    #allocation18 [shape = 's32[1]{0}', space=sflag, size = 0x4, scoped, tag = 'scoped memory for tpu_custom_call.1']
    #allocation19 [shape = 'u8[8192]{0}', space=vmem, size = 0x2000, scoped, tag = 'input window, operand 14, single buffered']
    #allocation20 [shape = 'u8[512]{0}', space=vmem, size = 0x400, scoped, tag = 'input window, operand 15, single buffered']
    #allocation21 [shape = 's32[1]{0}', space=sflag, size = 0x4, scoped, tag = 'scoped memory for tpu_custom_call.1']
    #allocation22 [shape = 'u8[8192]{0}', space=vmem, size = 0x2000, scoped, tag = 'output window, operand 0']
    %24 = vsyncpa [#allocation6], 0
    %25 = vsyncpa [#allocation9], 0
    %26 = vsyncpa [#allocation12], 0
    %27 = vsyncpa [#allocation15], 0
    %28 = vsyncpa [#allocation18], 0
    %29 = vsyncpa [#allocation21], 0
    %30 = vsyncpa [#allocation7], 0
    %s31 = scalar_lea.sflag [#allocation7], 1
    %32 = vsyncpa %s31, 0
    loop: start=0, step=1, limit=4
    $region2: #{tpu_custom_call.1} parent=1 // loop_pre_header
      _
    $region3: #{tpu_custom_call.1} parent=1 // loop_header
      %s34 = sphi 0, %s38
      %p35 = scmp.ge.s32.totalorder %s34, 4
      %s41 = sphi 0, %s53
      %s42 = sphi 0, %s49
      %s43 = sphi 0, %s41
      %s44 = sphi 0, %s42
      %s45 = sphi 0, %s43
      %s46 = sphi 0, %s44
      %s54 = sphi 0, %s54
      %s56 = sphi 0, %s54
      %s57 = sphi 0, %s56
      %s71 = sphi 0, %s57
      %s77 = sphi 0, %s79
      %s80 = sphi 0, %s77
      %s81 = sphi 0, %s80
      %s97 = sphi 0, %s81
      %s101 = sphi 0, %s101
      %s103 = sphi 0, %s101
      %s104 = sphi 0, %s103
      %s118 = sphi 0, %s104
      %s122 = sphi 0, %s122
      %s124 = sphi 0, %s122
      %s125 = sphi 0, %s124
      %s139 = sphi 0, %s125
      %s143 = sphi 0, %s143
      %s145 = sphi 0, %s143
      %s146 = sphi 0, %s145
      %s160 = sphi 0, %s146
      %s164 = sphi 0, %s164
      %s166 = sphi 0, %s164
      %s167 = sphi 0, %s166
      %s181 = sphi 0, %s167
      %s185 = sphi 0, %s185
      %s187 = sphi 0, %s185
      %s188 = sphi 0, %s187
      %s202 = sphi 0, %s188
      %s206 = sphi 0, %s206
      %s208 = sphi 0, %s206
      %s209 = sphi 0, %s208
      %s223 = sphi 0, %s209
      %s227 = sphi 0, %s227
      %s229 = sphi 0, %s227
      %s230 = sphi 0, %s229
      %s244 = sphi 0, %s230
      %s248 = sphi 0, %s248
      %s250 = sphi 0, %s248
      %s251 = sphi 0, %s250
      %s265 = sphi 0, %s251
      %s269 = sphi 0, %s269
      %s271 = sphi 0, %s269
      %s272 = sphi 0, %s271
      %s286 = sphi 0, %s272
      %s290 = sphi 0, %s290
      %s292 = sphi 0, %s290
      %s293 = sphi 0, %s292
      %s307 = sphi 0, %s293
      %s311 = sphi 0, %s311
      %s313 = sphi 0, %s311
      %s314 = sphi 0, %s313
      %s328 = sphi 0, %s314
      %s332 = sphi 0, %s332
      %s334 = sphi 0, %s332
      %s335 = sphi 0, %s334
      %s349 = sphi 0, %s335
      %s353 = sphi 0, %s353
      %s355 = sphi 0, %s353
      %s356 = sphi 0, %s355
      %s370 = sphi 0, %s356
      %s374 = sphi 0, %s374
      %s376 = sphi 0, %s374
      %s377 = sphi 0, %s376
      %s391 = sphi 0, %s377
      %s395 = sphi 0, %s395
      %s397 = sphi 0, %s395
      %s398 = sphi 0, %s397
      %s412 = sphi 0, %s398
      %s416 = sphi 0, %s416
      %s418 = sphi 0, %s416
      %s419 = sphi 0, %s418
      %s433 = sphi 0, %s419
      %s441 = sphi 0, %s443
      %s444 = sphi 0, %s441
      %s445 = sphi 0, %s444
      %s461 = sphi 0, %s445
    $region4: #{tpu_custom_call.1} parent=1 // loop_header_branch
      %37 = sbr.rel (%p35) target = $region8
    $region5: #{tpu_custom_call.1} parent=1 // loop_body
      %s39 = ssub.s32 %s34, 1
      %s40 = ssub.s32 %s34, 2
      %s47 = sadd.s32 1, %s42
      %p48 = scmp.ge.s32.totalorder %s47, 1
      %s49 = scalar_select %p48, 0, %s47
      %s50 = sadd.s32 1, %s41
      %s51 = scalar_select %p48, %s50, %s41
      %p52 = scmp.ge.s32.totalorder %s51, 2
      %s53 = scalar_select %p52, 0, %s51
      %s55 = sadd.s32 %s54, 1
      %p58 = scmp.eq.s32.totalorder %s34, 1
      %p59 = scmp.ne.s32.totalorder %s54, %s56
      %p60 = scmp.eq.s32.totalorder %s34, 0
      %p61 = por %p59, %p60
      %p62 = scmp.ne.s32.totalorder %s54, %s56
      %p63 = scmp.eq.s32.totalorder %s39, 1
      %p64 = por %p62, %p63
      %p65 = scmp.ne.s32.totalorder %s56, %s57
      %p66 = scmp.eq.s32.totalorder %s39, 0
      %p67 = por %p65, %p66
      %p68 = scmp.ne.s32.totalorder %s56, %s57
      %p69 = scmp.eq.s32.totalorder %s40, 1
      %p70 = por %p68, %p69
      %p72 = scmp.ne.s32.totalorder %s57, %s71
      %p73 = scmp.eq.s32.totalorder %s40, 0
      %p74 = por %p72, %p73
      %s75 = ssub.s32 %s41, %s53
      %p76 = scmp.eq.s32.totalorder %s75, 0
      %s78 = sadd.s32 %s77, 1
      %s79 = scalar_select %p76, %s77, %s78
      %p82 = pneg %p76
      %p83 = scmp.eq.s32.totalorder %s34, 1
      %p84 = por %p82, %p83
      %p85 = scmp.ne.s32.totalorder %s77, %s80
      %p86 = scmp.eq.s32.totalorder %s34, 0
      %p87 = por %p85, %p86
      %p88 = scmp.ne.s32.totalorder %s77, %s80
      %p89 = scmp.eq.s32.totalorder %s39, 1
      %p90 = por %p88, %p89
      %p91 = scmp.ne.s32.totalorder %s80, %s81
      %p92 = scmp.eq.s32.totalorder %s39, 0
      %p93 = por %p91, %p92
      %p94 = scmp.ne.s32.totalorder %s80, %s81
      %p95 = scmp.eq.s32.totalorder %s40, 1
      %p96 = por %p94, %p95
      %p98 = scmp.ne.s32.totalorder %s81, %s97
      %p99 = scmp.eq.s32.totalorder %s40, 0
      %p100 = por %p98, %p99
      %s102 = sadd.s32 %s101, 1
      %p105 = scmp.eq.s32.totalorder %s34, 1
      %p106 = scmp.ne.s32.totalorder %s101, %s103
      %p107 = scmp.eq.s32.totalorder %s34, 0
      %p108 = por %p106, %p107
      %p109 = scmp.ne.s32.totalorder %s101, %s103
      %p110 = scmp.eq.s32.totalorder %s39, 1
      %p111 = por %p109, %p110
      %p112 = scmp.ne.s32.totalorder %s103, %s104
      %p113 = scmp.eq.s32.totalorder %s39, 0
      %p114 = por %p112, %p113
      %p115 = scmp.ne.s32.totalorder %s103, %s104
      %p116 = scmp.eq.s32.totalorder %s40, 1
      %p117 = por %p115, %p116
      %p119 = scmp.ne.s32.totalorder %s104, %s118
      %p120 = scmp.eq.s32.totalorder %s40, 0
      %p121 = por %p119, %p120
      %s123 = sadd.s32 %s122, 1
      %p126 = scmp.eq.s32.totalorder %s34, 1
      %p127 = scmp.ne.s32.totalorder %s122, %s124
      %p128 = scmp.eq.s32.totalorder %s34, 0
      %p129 = por %p127, %p128
      %p130 = scmp.ne.s32.totalorder %s122, %s124
      %p131 = scmp.eq.s32.totalorder %s39, 1
      %p132 = por %p130, %p131
      %p133 = scmp.ne.s32.totalorder %s124, %s125
      %p134 = scmp.eq.s32.totalorder %s39, 0
      %p135 = por %p133, %p134
      %p136 = scmp.ne.s32.totalorder %s124, %s125
      %p137 = scmp.eq.s32.totalorder %s40, 1
      %p138 = por %p136, %p137
      %p140 = scmp.ne.s32.totalorder %s125, %s139
      %p141 = scmp.eq.s32.totalorder %s40, 0
      %p142 = por %p140, %p141
      %s144 = sadd.s32 %s143, 1
      %p147 = scmp.eq.s32.totalorder %s34, 1
      %p148 = scmp.ne.s32.totalorder %s143, %s145
      %p149 = scmp.eq.s32.totalorder %s34, 0
      %p150 = por %p148, %p149
      %p151 = scmp.ne.s32.totalorder %s143, %s145
      %p152 = scmp.eq.s32.totalorder %s39, 1
      %p153 = por %p151, %p152
      %p154 = scmp.ne.s32.totalorder %s145, %s146
      %p155 = scmp.eq.s32.totalorder %s39, 0
      %p156 = por %p154, %p155
      %p157 = scmp.ne.s32.totalorder %s145, %s146
      %p158 = scmp.eq.s32.totalorder %s40, 1
      %p159 = por %p157, %p158
      %p161 = scmp.ne.s32.totalorder %s146, %s160
      %p162 = scmp.eq.s32.totalorder %s40, 0
      %p163 = por %p161, %p162
      %s165 = sadd.s32 %s164, 1
      %p168 = scmp.eq.s32.totalorder %s34, 1
      %p169 = scmp.ne.s32.totalorder %s164, %s166
      %p170 = scmp.eq.s32.totalorder %s34, 0
      %p171 = por %p169, %p170
      %p172 = scmp.ne.s32.totalorder %s164, %s166
      %p173 = scmp.eq.s32.totalorder %s39, 1
      %p174 = por %p172, %p173
      %p175 = scmp.ne.s32.totalorder %s166, %s167
      %p176 = scmp.eq.s32.totalorder %s39, 0
      %p177 = por %p175, %p176
      %p178 = scmp.ne.s32.totalorder %s166, %s167
      %p179 = scmp.eq.s32.totalorder %s40, 1
      %p180 = por %p178, %p179
      %p182 = scmp.ne.s32.totalorder %s167, %s181
      %p183 = scmp.eq.s32.totalorder %s40, 0
      %p184 = por %p182, %p183
      %s186 = sadd.s32 %s185, 1
      %p189 = scmp.eq.s32.totalorder %s34, 1
      %p190 = scmp.ne.s32.totalorder %s185, %s187
      %p191 = scmp.eq.s32.totalorder %s34, 0
      %p192 = por %p190, %p191
      %p193 = scmp.ne.s32.totalorder %s185, %s187
      %p194 = scmp.eq.s32.totalorder %s39, 1
      %p195 = por %p193, %p194
      %p196 = scmp.ne.s32.totalorder %s187, %s188
      %p197 = scmp.eq.s32.totalorder %s39, 0
      %p198 = por %p196, %p197
      %p199 = scmp.ne.s32.totalorder %s187, %s188
      %p200 = scmp.eq.s32.totalorder %s40, 1
      %p201 = por %p199, %p200
      %p203 = scmp.ne.s32.totalorder %s188, %s202
      %p204 = scmp.eq.s32.totalorder %s40, 0
      %p205 = por %p203, %p204
      %s207 = sadd.s32 %s206, 1
      %p210 = scmp.eq.s32.totalorder %s34, 1
      %p211 = scmp.ne.s32.totalorder %s206, %s208
      %p212 = scmp.eq.s32.totalorder %s34, 0
      %p213 = por %p211, %p212
      %p214 = scmp.ne.s32.totalorder %s206, %s208
      %p215 = scmp.eq.s32.totalorder %s39, 1
      %p216 = por %p214, %p215
      %p217 = scmp.ne.s32.totalorder %s208, %s209
      %p218 = scmp.eq.s32.totalorder %s39, 0
      %p219 = por %p217, %p218
      %p220 = scmp.ne.s32.totalorder %s208, %s209
      %p221 = scmp.eq.s32.totalorder %s40, 1
      %p222 = por %p220, %p221
      %p224 = scmp.ne.s32.totalorder %s209, %s223
      %p225 = scmp.eq.s32.totalorder %s40, 0
      %p226 = por %p224, %p225
      %s228 = sadd.s32 %s227, 1
      %p231 = scmp.eq.s32.totalorder %s34, 1
      %p232 = scmp.ne.s32.totalorder %s227, %s229
      %p233 = scmp.eq.s32.totalorder %s34, 0
      %p234 = por %p232, %p233
      %p235 = scmp.ne.s32.totalorder %s227, %s229
      %p236 = scmp.eq.s32.totalorder %s39, 1
      %p237 = por %p235, %p236
      %p238 = scmp.ne.s32.totalorder %s229, %s230
      %p239 = scmp.eq.s32.totalorder %s39, 0
      %p240 = por %p238, %p239
      %p241 = scmp.ne.s32.totalorder %s229, %s230
      %p242 = scmp.eq.s32.totalorder %s40, 1
      %p243 = por %p241, %p242
      %p245 = scmp.ne.s32.totalorder %s230, %s244
      %p246 = scmp.eq.s32.totalorder %s40, 0
      %p247 = por %p245, %p246
      %s249 = sadd.s32 %s248, 1
      %p252 = scmp.eq.s32.totalorder %s34, 1
      %p253 = scmp.ne.s32.totalorder %s248, %s250
      %p254 = scmp.eq.s32.totalorder %s34, 0
      %p255 = por %p253, %p254
      %p256 = scmp.ne.s32.totalorder %s248, %s250
      %p257 = scmp.eq.s32.totalorder %s39, 1
      %p258 = por %p256, %p257
      %p259 = scmp.ne.s32.totalorder %s250, %s251
      %p260 = scmp.eq.s32.totalorder %s39, 0
      %p261 = por %p259, %p260
      %p262 = scmp.ne.s32.totalorder %s250, %s251
      %p263 = scmp.eq.s32.totalorder %s40, 1
      %p264 = por %p262, %p263
      %p266 = scmp.ne.s32.totalorder %s251, %s265
      %p267 = scmp.eq.s32.totalorder %s40, 0
      %p268 = por %p266, %p267
      %s270 = sadd.s32 %s269, 1
      %p273 = scmp.eq.s32.totalorder %s34, 1
      %p274 = scmp.ne.s32.totalorder %s269, %s271
      %p275 = scmp.eq.s32.totalorder %s34, 0
      %p276 = por %p274, %p275
      %p277 = scmp.ne.s32.totalorder %s269, %s271
      %p278 = scmp.eq.s32.totalorder %s39, 1
      %p279 = por %p277, %p278
      %p280 = scmp.ne.s32.totalorder %s271, %s272
      %p281 = scmp.eq.s32.totalorder %s39, 0
      %p282 = por %p280, %p281
      %p283 = scmp.ne.s32.totalorder %s271, %s272
      %p284 = scmp.eq.s32.totalorder %s40, 1
      %p285 = por %p283, %p284
      %p287 = scmp.ne.s32.totalorder %s272, %s286
      %p288 = scmp.eq.s32.totalorder %s40, 0
      %p289 = por %p287, %p288
      %s291 = sadd.s32 %s290, 1
      %p294 = scmp.eq.s32.totalorder %s34, 1
      %p295 = scmp.ne.s32.totalorder %s290, %s292
      %p296 = scmp.eq.s32.totalorder %s34, 0
      %p297 = por %p295, %p296
      %p298 = scmp.ne.s32.totalorder %s290, %s292
      %p299 = scmp.eq.s32.totalorder %s39, 1
      %p300 = por %p298, %p299
      %p301 = scmp.ne.s32.totalorder %s292, %s293
      %p302 = scmp.eq.s32.totalorder %s39, 0
      %p303 = por %p301, %p302
      %p304 = scmp.ne.s32.totalorder %s292, %s293
      %p305 = scmp.eq.s32.totalorder %s40, 1
      %p306 = por %p304, %p305
      %p308 = scmp.ne.s32.totalorder %s293, %s307
      %p309 = scmp.eq.s32.totalorder %s40, 0
      %p310 = por %p308, %p309
      %s312 = sadd.s32 %s311, 1
      %p315 = scmp.eq.s32.totalorder %s34, 1
      %p316 = scmp.ne.s32.totalorder %s311, %s313
      %p317 = scmp.eq.s32.totalorder %s34, 0
      %p318 = por %p316, %p317
      %p319 = scmp.ne.s32.totalorder %s311, %s313
      %p320 = scmp.eq.s32.totalorder %s39, 1
      %p321 = por %p319, %p320
      %p322 = scmp.ne.s32.totalorder %s313, %s314
      %p323 = scmp.eq.s32.totalorder %s39, 0
      %p324 = por %p322, %p323
      %p325 = scmp.ne.s32.totalorder %s313, %s314
      %p326 = scmp.eq.s32.totalorder %s40, 1
      %p327 = por %p325, %p326
      %p329 = scmp.ne.s32.totalorder %s314, %s328
      %p330 = scmp.eq.s32.totalorder %s40, 0
      %p331 = por %p329, %p330
      %s333 = sadd.s32 %s332, 1
      %p336 = scmp.eq.s32.totalorder %s34, 1
      %p337 = scmp.ne.s32.totalorder %s332, %s334
      %p338 = scmp.eq.s32.totalorder %s34, 0
      %p339 = por %p337, %p338
      %p340 = scmp.ne.s32.totalorder %s332, %s334
      %p341 = scmp.eq.s32.totalorder %s39, 1
      %p342 = por %p340, %p341
      %p343 = scmp.ne.s32.totalorder %s334, %s335
      %p344 = scmp.eq.s32.totalorder %s39, 0
      %p345 = por %p343, %p344
      %p346 = scmp.ne.s32.totalorder %s334, %s335
      %p347 = scmp.eq.s32.totalorder %s40, 1
      %p348 = por %p346, %p347
      %p350 = scmp.ne.s32.totalorder %s335, %s349
      %p351 = scmp.eq.s32.totalorder %s40, 0
      %p352 = por %p350, %p351
      %s354 = sadd.s32 %s353, 1
      %p357 = scmp.eq.s32.totalorder %s34, 1
      %p358 = scmp.ne.s32.totalorder %s353, %s355
      %p359 = scmp.eq.s32.totalorder %s34, 0
      %p360 = por %p358, %p359
      %p361 = scmp.ne.s32.totalorder %s353, %s355
      %p362 = scmp.eq.s32.totalorder %s39, 1
      %p363 = por %p361, %p362
      %p364 = scmp.ne.s32.totalorder %s355, %s356
      %p365 = scmp.eq.s32.totalorder %s39, 0
      %p366 = por %p364, %p365
      %p367 = scmp.ne.s32.totalorder %s355, %s356
      %p368 = scmp.eq.s32.totalorder %s40, 1
      %p369 = por %p367, %p368
      %p371 = scmp.ne.s32.totalorder %s356, %s370
      %p372 = scmp.eq.s32.totalorder %s40, 0
      %p373 = por %p371, %p372
      %s375 = sadd.s32 %s374, 1
      %p378 = scmp.eq.s32.totalorder %s34, 1
      %p379 = scmp.ne.s32.totalorder %s374, %s376
      %p380 = scmp.eq.s32.totalorder %s34, 0
      %p381 = por %p379, %p380
      %p382 = scmp.ne.s32.totalorder %s374, %s376
      %p383 = scmp.eq.s32.totalorder %s39, 1
      %p384 = por %p382, %p383
      %p385 = scmp.ne.s32.totalorder %s376, %s377
      %p386 = scmp.eq.s32.totalorder %s39, 0
      %p387 = por %p385, %p386
      %p388 = scmp.ne.s32.totalorder %s376, %s377
      %p389 = scmp.eq.s32.totalorder %s40, 1
      %p390 = por %p388, %p389
      %p392 = scmp.ne.s32.totalorder %s377, %s391
      %p393 = scmp.eq.s32.totalorder %s40, 0
      %p394 = por %p392, %p393
      %s396 = sadd.s32 %s395, 1
      %p399 = scmp.eq.s32.totalorder %s34, 1
      %p400 = scmp.ne.s32.totalorder %s395, %s397
      %p401 = scmp.eq.s32.totalorder %s34, 0
      %p402 = por %p400, %p401
      %p403 = scmp.ne.s32.totalorder %s395, %s397
      %p404 = scmp.eq.s32.totalorder %s39, 1
      %p405 = por %p403, %p404
      %p406 = scmp.ne.s32.totalorder %s397, %s398
      %p407 = scmp.eq.s32.totalorder %s39, 0
      %p408 = por %p406, %p407
      %p409 = scmp.ne.s32.totalorder %s397, %s398
      %p410 = scmp.eq.s32.totalorder %s40, 1
      %p411 = por %p409, %p410
      %p413 = scmp.ne.s32.totalorder %s398, %s412
      %p414 = scmp.eq.s32.totalorder %s40, 0
      %p415 = por %p413, %p414
      %s417 = sadd.s32 %s416, 1
      %p420 = scmp.eq.s32.totalorder %s34, 1
      %p421 = scmp.ne.s32.totalorder %s416, %s418
      %p422 = scmp.eq.s32.totalorder %s34, 0
      %p423 = por %p421, %p422
      %p424 = scmp.ne.s32.totalorder %s416, %s418
      %p425 = scmp.eq.s32.totalorder %s39, 1
      %p426 = por %p424, %p425
      %p427 = scmp.ne.s32.totalorder %s418, %s419
      %p428 = scmp.eq.s32.totalorder %s39, 0
      %p429 = por %p427, %p428
      %p430 = scmp.ne.s32.totalorder %s418, %s419
      %p431 = scmp.eq.s32.totalorder %s40, 1
      %p432 = por %p430, %p431
      %p434 = scmp.ne.s32.totalorder %s419, %s433
      %p435 = scmp.eq.s32.totalorder %s40, 0
      %p436 = por %p434, %p435
      %s437 = ssub.s32 %s41, %s53
      %s438 = ssub.s32 %s42, %s49
      %s439 = sor.u32 %s437, %s438
      %p440 = scmp.eq.s32.totalorder %s439, 0
      %s442 = sadd.s32 %s441, 1
      %s443 = scalar_select %p440, %s441, %s442
      %p446 = pneg %p440
      %p447 = scmp.eq.s32.totalorder %s34, 1
      %p448 = por %p446, %p447
      %p449 = scmp.ne.s32.totalorder %s441, %s444
      %p450 = scmp.eq.s32.totalorder %s34, 0
      %p451 = por %p449, %p450
      %p452 = scmp.ne.s32.totalorder %s441, %s444
      %p453 = scmp.eq.s32.totalorder %s39, 1
      %p454 = por %p452, %p453
      %p455 = scmp.ne.s32.totalorder %s444, %s445
      %p456 = scmp.eq.s32.totalorder %s39, 0
      %p457 = por %p455, %p456
      %p458 = scmp.ne.s32.totalorder %s444, %s445
      %p459 = scmp.eq.s32.totalorder %s40, 1
      %p460 = por %p458, %p459
      %p462 = scmp.ne.s32.totalorder %s445, %s461
      %p463 = scmp.eq.s32.totalorder %s40, 0
      %p464 = por %p462, %p463
      %p465 = scmp.le.s32.totalorder 1, %s34
      %p466 = scmp.lt.s32.totalorder %s34, 3
      %p467 = pnand %p465, %p466
      %p468 = pneg %p467
      // Predicated region
      $region9: #{tpu_custom_call.1} parent=5 // pred_check
        _
      $region10: #{tpu_custom_call.1} parent=5 // pred_check_branch
        %470 = sbr.rel (%p467) target = $region12
      $region11: #{tpu_custom_call.1} parent=5 // pred_region
        %s471 = ssub.s32 %s34, 1
        // Predicated region
        $region13: #{tpu_custom_call.1} parent=11 // pred_check
          %p472 = pneg %p67
        $region14: #{tpu_custom_call.1} parent=11 // pred_check_branch
          %474 = sbr.rel (%p472) target = $region16
        $region15: #{tpu_custom_call.1} parent=11 // pred_region
          _
        $region16: #{tpu_custom_call.1} parent=11 // pred_fallthru
          _
        // Predicated region
        $region17: #{tpu_custom_call.1} parent=11 // pred_check
          %p475 = pneg %p114
        $region18: #{tpu_custom_call.1} parent=11 // pred_check_branch
          %477 = sbr.rel (%p475) target = $region20
        $region19: #{tpu_custom_call.1} parent=11 // pred_region
          %479 = vsyncadd [#allocation6], 0
          %s481 = sshll.u32 %s2, 4
          %s482 = int_to_ptr.hbm [resolvable:$true] %s481
          %s483 = sshll.u32 [#allocation5], 4
          %s484 = int_to_ptr.vmem [resolvable:$true] %s483
          %486 = dma.hbm_to_vmem [thread:$0]  %s482, 16, %s484, [#allocation6]
        $region20: #{tpu_custom_call.1} parent=11 // pred_fallthru
          _
        // Predicated region
        $region21: #{tpu_custom_call.1} parent=11 // pred_check
          %p487 = pneg %p135
        $region22: #{tpu_custom_call.1} parent=11 // pred_check_branch
          %489 = sbr.rel (%p487) target = $region24
        $region23: #{tpu_custom_call.1} parent=11 // pred_region
          %491 = vsyncadd [#allocation9], 0
          %s493 = sshll.u32 %s3, 4
          %s494 = int_to_ptr.hbm [resolvable:$true] %s493
          %s495 = sshll.u32 [#allocation8], 4
          %s496 = int_to_ptr.vmem [resolvable:$true] %s495
          %498 = dma.hbm_to_vmem [thread:$0]  %s494, 16, %s496, [#allocation9]
        $region24: #{tpu_custom_call.1} parent=11 // pred_fallthru
          _
        // Predicated region
        $region25: #{tpu_custom_call.1} parent=11 // pred_check
          %p499 = pneg %p156
        $region26: #{tpu_custom_call.1} parent=11 // pred_check_branch
          %501 = sbr.rel (%p499) target = $region28
        $region27: #{tpu_custom_call.1} parent=11 // pred_region
          _
        $region28: #{tpu_custom_call.1} parent=11 // pred_fallthru
          _
        // Predicated region
        $region29: #{tpu_custom_call.1} parent=11 // pred_check
          %p502 = pneg %p177
        $region30: #{tpu_custom_call.1} parent=11 // pred_check_branch
          %504 = sbr.rel (%p502) target = $region32
        $region31: #{tpu_custom_call.1} parent=11 // pred_region
          _
        $region32: #{tpu_custom_call.1} parent=11 // pred_fallthru
          _
        // Predicated region
        $region33: #{tpu_custom_call.1} parent=11 // pred_check
          %p505 = pneg %p198
        $region34: #{tpu_custom_call.1} parent=11 // pred_check_branch
          %507 = sbr.rel (%p505) target = $region36
        $region35: #{tpu_custom_call.1} parent=11 // pred_region
          _
        $region36: #{tpu_custom_call.1} parent=11 // pred_fallthru
          _
        // Predicated region
        $region37: #{tpu_custom_call.1} parent=11 // pred_check
          %p508 = pneg %p219
        $region38: #{tpu_custom_call.1} parent=11 // pred_check_branch
          %510 = sbr.rel (%p508) target = $region40
        $region39: #{tpu_custom_call.1} parent=11 // pred_region
          %512 = vsyncadd [#allocation9], 0
          %s514 = sshll.u32 %s7, 4
          %s515 = int_to_ptr.hbm [resolvable:$true] %s514
          %s516 = sshll.u32 [#allocation10], 4
          %s517 = int_to_ptr.vmem [resolvable:$true] %s516
          %519 = dma.hbm_to_vmem [thread:$0]  %s515, 16, %s517, [#allocation9]
        $region40: #{tpu_custom_call.1} parent=11 // pred_fallthru
          _
        // Predicated region
        $region41: #{tpu_custom_call.1} parent=11 // pred_check
          %p520 = pneg %p240
        $region42: #{tpu_custom_call.1} parent=11 // pred_check_branch
          %522 = sbr.rel (%p520) target = $region44
        $region43: #{tpu_custom_call.1} parent=11 // pred_region
          %524 = vsyncadd [#allocation12], 0
          %s526 = sshll.u32 %s8, 4
          %s527 = int_to_ptr.hbm [resolvable:$true] %s526
          %s528 = sshll.u32 [#allocation11], 4
          %s529 = int_to_ptr.vmem [resolvable:$true] %s528
          %531 = dma.hbm_to_vmem [thread:$0]  %s527, 16, %s529, [#allocation12]
        $region44: #{tpu_custom_call.1} parent=11 // pred_fallthru
          _
        // Predicated region
        $region45: #{tpu_custom_call.1} parent=11 // pred_check
          %p532 = pneg %p261
        $region46: #{tpu_custom_call.1} parent=11 // pred_check_branch
          %534 = sbr.rel (%p532) target = $region48
        $region47: #{tpu_custom_call.1} parent=11 // pred_region
          %536 = vsyncadd [#allocation12], 0
          %s538 = sshll.u32 %s9, 4
          %s539 = int_to_ptr.hbm [resolvable:$true] %s538
          %s540 = sshll.u32 [#allocation13], 4
          %s541 = int_to_ptr.vmem [resolvable:$true] %s540
          %543 = dma.hbm_to_vmem [thread:$0]  %s539, 16, %s541, [#allocation12]
        $region48: #{tpu_custom_call.1} parent=11 // pred_fallthru
          _
        // Predicated region
        $region49: #{tpu_custom_call.1} parent=11 // pred_check
          %p544 = pneg %p282
        $region50: #{tpu_custom_call.1} parent=11 // pred_check_branch
          %546 = sbr.rel (%p544) target = $region52
        $region51: #{tpu_custom_call.1} parent=11 // pred_region
          _
        $region52: #{tpu_custom_call.1} parent=11 // pred_fallthru
          _
        // Predicated region
        $region53: #{tpu_custom_call.1} parent=11 // pred_check
          %p547 = pneg %p303
        $region54: #{tpu_custom_call.1} parent=11 // pred_check_branch
          %549 = sbr.rel (%p547) target = $region56
        $region55: #{tpu_custom_call.1} parent=11 // pred_region
          %551 = vsyncadd [#allocation15], 0
          %s553 = sshll.u32 %s11, 4
          %s554 = int_to_ptr.hbm [resolvable:$true] %s553
          %s555 = sshll.u32 [#allocation14], 4
          %s556 = int_to_ptr.vmem [resolvable:$true] %s555
          %558 = dma.hbm_to_vmem [thread:$0]  %s554, 16, %s556, [#allocation15]
        $region56: #{tpu_custom_call.1} parent=11 // pred_fallthru
          _
        // Predicated region
        $region57: #{tpu_custom_call.1} parent=11 // pred_check
          %p559 = pneg %p324
        $region58: #{tpu_custom_call.1} parent=11 // pred_check_branch
          %561 = sbr.rel (%p559) target = $region60
        $region59: #{tpu_custom_call.1} parent=11 // pred_region
          %563 = vsyncadd [#allocation15], 0
          %s565 = sshll.u32 %s12, 4
          %s566 = int_to_ptr.hbm [resolvable:$true] %s565
          %s567 = sshll.u32 [#allocation16], 4
          %s568 = int_to_ptr.vmem [resolvable:$true] %s567
          %570 = dma.hbm_to_vmem [thread:$0]  %s566, 16, %s568, [#allocation15]
        $region60: #{tpu_custom_call.1} parent=11 // pred_fallthru
          _
        // Predicated region
        $region61: #{tpu_custom_call.1} parent=11 // pred_check
          %p571 = pneg %p345
        $region62: #{tpu_custom_call.1} parent=11 // pred_check_branch
          %573 = sbr.rel (%p571) target = $region64
        $region63: #{tpu_custom_call.1} parent=11 // pred_region
          %575 = vsyncadd [#allocation18], 0
          %s577 = sshll.u32 %s13, 4
          %s578 = int_to_ptr.hbm [resolvable:$true] %s577
          %s579 = sshll.u32 [#allocation17], 4
          %s580 = int_to_ptr.vmem [resolvable:$true] %s579
          %582 = dma.hbm_to_vmem [thread:$0]  %s578, 16, %s580, [#allocation18]
        $region64: #{tpu_custom_call.1} parent=11 // pred_fallthru
          _
        // Predicated region
        $region65: #{tpu_custom_call.1} parent=11 // pred_check
          %p583 = pneg %p366
        $region66: #{tpu_custom_call.1} parent=11 // pred_check_branch
          %585 = sbr.rel (%p583) target = $region68
        $region67: #{tpu_custom_call.1} parent=11 // pred_region
          %587 = vsyncadd [#allocation18], 0
          %s588 = sshll.u32 %s14, 4
          %s589 = int_to_ptr.hbm [resolvable:$true] %s588
          %s590 = sshll.u32 [#allocation19], 4
          %s591 = int_to_ptr.vmem [resolvable:$true] %s590
          %596 = dma.hbm_to_vmem [thread:$0]  %s589, 256, %s591, [#allocation18], 64, 64, 4
        $region68: #{tpu_custom_call.1} parent=11 // pred_fallthru
          _
        // Predicated region
        $region69: #{tpu_custom_call.1} parent=11 // pred_check
          %p597 = pneg %p387
        $region70: #{tpu_custom_call.1} parent=11 // pred_check_branch
          %599 = sbr.rel (%p597) target = $region72
        $region71: #{tpu_custom_call.1} parent=11 // pred_region
          %601 = vsyncadd [#allocation21], 0
          %s603 = sshll.u32 %s15, 4
          %s604 = int_to_ptr.hbm [resolvable:$true] %s603
          %s605 = sshll.u32 [#allocation20], 4
          %s606 = int_to_ptr.vmem [resolvable:$true] %s605
          %608 = dma.hbm_to_vmem [thread:$0]  %s604, 16, %s606, [#allocation21]
        $region72: #{tpu_custom_call.1} parent=11 // pred_fallthru
          _
        // Predicated region
        $region73: #{tpu_custom_call.1} parent=11 // pred_check
          %p609 = pneg %p408
        $region74: #{tpu_custom_call.1} parent=11 // pred_check_branch
          %611 = sbr.rel (%p609) target = $region76
        $region75: #{tpu_custom_call.1} parent=11 // pred_region
          _
        $region76: #{tpu_custom_call.1} parent=11 // pred_fallthru
          _
        // Predicated region
        $region77: #{tpu_custom_call.1} parent=11 // pred_check
          %p612 = pneg %p429
        $region78: #{tpu_custom_call.1} parent=11 // pred_check_branch
          %614 = sbr.rel (%p612) target = $region80
        $region79: #{tpu_custom_call.1} parent=11 // pred_region
          _
        $region80: #{tpu_custom_call.1} parent=11 // pred_fallthru
          _
      $region12: #{tpu_custom_call.1} parent=5 // pred_fallthru
        _
      %p615 = scmp.lt.s32.totalorder %s34, 2
      // Predicated region
      $region81: #{tpu_custom_call.1} parent=5 // pred_check
        %p616 = pneg %p615
      $region82: #{tpu_custom_call.1} parent=5 // pred_check_branch
        %618 = sbr.rel (%p616) target = $region84
      $region83: #{tpu_custom_call.1} parent=5 // pred_region
        // Predicated region
        $region85: #{tpu_custom_call.1} parent=83 // pred_check
          %p619 = pneg %p87
        $region86: #{tpu_custom_call.1} parent=83 // pred_check_branch
          %621 = sbr.rel (%p619) target = $region88
        $region87: #{tpu_custom_call.1} parent=83 // pred_region
          %p622 = scmp.lt.s32.totalorder %s41, 1
          %s623 = scalar_select %p622, %s41, 1
          %s624 = smul.addr %s623, 8
          %s625 = scalar_lea.vmem %s1, %s624
        $region88: #{tpu_custom_call.1} parent=83 // pred_fallthru
          _
      $region84: #{tpu_custom_call.1} parent=5 // pred_fallthru
        _
      %p626 = scmp.le.s32.totalorder 1, %s34
      %p627 = scmp.lt.s32.totalorder %s34, 3
      %p628 = pnand %p626, %p627
      %p629 = pneg %p628
      // Predicated region
      $region89: #{tpu_custom_call.1} parent=5 // pred_check
        _
      $region90: #{tpu_custom_call.1} parent=5 // pred_check_branch
        %631 = sbr.rel (%p628) target = $region92
      $region91: #{tpu_custom_call.1} parent=5 // pred_region
        %s632 = ssub.s32 %s34, 1
        // Predicated region
        $region93: #{tpu_custom_call.1} parent=91 // pred_check
          %p633 = pneg %p114
        $region94: #{tpu_custom_call.1} parent=91 // pred_check_branch
          %635 = sbr.rel (%p633) target = $region96
        $region95: #{tpu_custom_call.1} parent=91 // pred_region
          %637 = dma.done [#allocation6], 16
        $region96: #{tpu_custom_call.1} parent=91 // pred_fallthru
          _
        // Predicated region
        $region97: #{tpu_custom_call.1} parent=91 // pred_check
          %p638 = pneg %p135
        $region98: #{tpu_custom_call.1} parent=91 // pred_check_branch
          %640 = sbr.rel (%p638) target = $region100
        $region99: #{tpu_custom_call.1} parent=91 // pred_region
          %642 = dma.done [#allocation9], 16
        $region100: #{tpu_custom_call.1} parent=91 // pred_fallthru
          _
        // Predicated region
        $region101: #{tpu_custom_call.1} parent=91 // pred_check
          %p643 = pneg %p219
        $region102: #{tpu_custom_call.1} parent=91 // pred_check_branch
          %645 = sbr.rel (%p643) target = $region104
        $region103: #{tpu_custom_call.1} parent=91 // pred_region
          %647 = dma.done [#allocation9], 16
        $region104: #{tpu_custom_call.1} parent=91 // pred_fallthru
          _
        // Predicated region
        $region105: #{tpu_custom_call.1} parent=91 // pred_check
          %p648 = pneg %p240
        $region106: #{tpu_custom_call.1} parent=91 // pred_check_branch
          %650 = sbr.rel (%p648) target = $region108
        $region107: #{tpu_custom_call.1} parent=91 // pred_region
          %652 = dma.done [#allocation12], 16
        $region108: #{tpu_custom_call.1} parent=91 // pred_fallthru
          _
        // Predicated region
        $region109: #{tpu_custom_call.1} parent=91 // pred_check
          %p653 = pneg %p261
        $region110: #{tpu_custom_call.1} parent=91 // pred_check_branch
          %655 = sbr.rel (%p653) target = $region112
        $region111: #{tpu_custom_call.1} parent=91 // pred_region
          %657 = dma.done [#allocation12], 16
        $region112: #{tpu_custom_call.1} parent=91 // pred_fallthru
          _
        // Predicated region
        $region113: #{tpu_custom_call.1} parent=91 // pred_check
          %p658 = pneg %p303
        $region114: #{tpu_custom_call.1} parent=91 // pred_check_branch
          %660 = sbr.rel (%p658) target = $region116
        $region115: #{tpu_custom_call.1} parent=91 // pred_region
          %662 = dma.done [#allocation15], 16
        $region116: #{tpu_custom_call.1} parent=91 // pred_fallthru
          _
        // Predicated region
        $region117: #{tpu_custom_call.1} parent=91 // pred_check
          %p663 = pneg %p324
        $region118: #{tpu_custom_call.1} parent=91 // pred_check_branch
          %665 = sbr.rel (%p663) target = $region120
        $region119: #{tpu_custom_call.1} parent=91 // pred_region
          %667 = dma.done [#allocation15], 16
        $region120: #{tpu_custom_call.1} parent=91 // pred_fallthru
          _
        // Predicated region
        $region121: #{tpu_custom_call.1} parent=91 // pred_check
          %p668 = pneg %p345
        $region122: #{tpu_custom_call.1} parent=91 // pred_check_branch
          %670 = sbr.rel (%p668) target = $region124
        $region123: #{tpu_custom_call.1} parent=91 // pred_region
          %672 = dma.done [#allocation18], 16
        $region124: #{tpu_custom_call.1} parent=91 // pred_fallthru
          _
        // Predicated region
        $region125: #{tpu_custom_call.1} parent=91 // pred_check
          %p673 = pneg %p366
        $region126: #{tpu_custom_call.1} parent=91 // pred_check_branch
          %675 = sbr.rel (%p673) target = $region128
        $region127: #{tpu_custom_call.1} parent=91 // pred_region
          %677 = dma.done [#allocation18], 256
        $region128: #{tpu_custom_call.1} parent=91 // pred_fallthru
          _
        // Predicated region
        $region129: #{tpu_custom_call.1} parent=91 // pred_check
          %p678 = pneg %p387
        $region130: #{tpu_custom_call.1} parent=91 // pred_check_branch
          %680 = sbr.rel (%p678) target = $region132
        $region131: #{tpu_custom_call.1} parent=91 // pred_region
          %682 = dma.done [#allocation21], 16
        $region132: #{tpu_custom_call.1} parent=91 // pred_fallthru
          _
        %p683 = pneg %p67
        %p684 = pneg %p64
        %p685 = scmp.lt.s32.totalorder %s43, 1
        %s686 = scalar_select %p685, %s43, 1
        %s687 = smul.addr %s686, 8
        %s688 = scalar_lea.vmem %s1, %s687
        %p689 = pneg %p93
        %p690 = pneg %p90
        %p691 = pneg %p114
        %p692 = pneg %p111
        %p693 = pneg %p135
        %p694 = pneg %p132
        %p695 = pneg %p156
        %p696 = pneg %p153
        %p697 = pneg %p177
        %p698 = pneg %p174
        %p699 = pneg %p198
        %p700 = pneg %p195
        %p701 = pneg %p219
        %p702 = pneg %p216
        %p703 = pneg %p240
        %p704 = pneg %p237
        %p705 = pneg %p261
        %p706 = pneg %p258
        %p707 = pneg %p282
        %p708 = pneg %p279
        %p709 = pneg %p303
        %p710 = pneg %p300
        %p711 = pneg %p324
        %p712 = pneg %p321
        %p713 = pneg %p345
        %p714 = pneg %p342
        %p715 = pneg %p366
        %p716 = pneg %p363
        %p717 = pneg %p387
        %p718 = pneg %p384
        %p719 = pneg %p408
        %p720 = pneg %p405
        %p721 = pneg %p429
        %p722 = pneg %p426
        %p723 = pneg %p457
        %p724 = pneg %p454
        %s725 = sand.u32 %s444, 1
        %s726 = scalar_lea.sflag [#allocation7], %s725
        %s727 = sand.u32 %s444, 1
        %s728 = smul.addr %s727, 8
        %s729 = scalar_lea.vmem [#allocation22], %s728
        %p730 = scmp.lt.s32.totalorder %s43, 1
        %s731 = scalar_select %p730, %s43, 1
        %s732 = smul.addr %s731, 8
        %s733 = scalar_lea.vmem %s1, %s732
        %p735 = scmp.eq.s32.totalorder %s44, 0
        // Predicated region
        $region133: #{tpu_custom_call.1} parent=91 // pred_check
          %p736 = pneg %p735
        $region134: #{tpu_custom_call.1} parent=91 // pred_check_branch
          %738 = sbr.rel (%p736) target = $region136
        $region135: #{tpu_custom_call.1} parent=91 // pred_region
          %v739 = vld [vmem:[%s733] sm:$0xff]
          %v740 = vld [vmem:[#allocation5] sm:$0x1]
          %v741 = vld [vmem:[#allocation8] sm:$0x1]
          %vm742 = vcmask 261120
          %v743 = vsel %vm742, %v739, 0.0
          %744 = vadd.xlane.f32.xlu0 %v743
          %v745 = vpop.xlane.xlu0 %744
          %v746 = vrcp.pop 32.0
          %v747 = vmul.f32 32.0, %v746
          %v748 = vsub.f32 1.0, %v747
          %v749 = vmul.f32 %v746, %v748
          %v750 = vadd.f32 %v746, %v749
          %vm751 = vweird.f32 %v746
          %v752 = vsel %vm751, %v746, %v750
          %v753 = vmul.f32 %v745, %v752
          %v754 = vsub.f32 %v739, %v753
          %v755 = vmul.f32 %v754, %v754
          %v756 = vsel %vm742, %v755, 0.0
          %757 = vadd.xlane.f32.xlu0 %v756
          %v758 = vpop.xlane.xlu0 %757
          %v759 = vmul.f32 %v758, %v752
          %v760 = vadd.f32 %v759, 1e-05
          %v761 = vrsqrt.pop %v760
          %v762 = vmul.f32 %v761, %v760
          %v763 = vmul.f32 %v762, %v761
          %v764 = vmul.f32 0.5, %v763
          %v765 = vsub.f32 1.5, %v764
          %v766 = vmul.f32 %v761, %v765
          %vm767 = vweird.f32 %v760
          %vm768 = vweird.f32 %v761
          %vm769 = vmor %vm767, %vm768
          %v770 = vsel %vm769, %v761, %v766
          %v771 = vmul.f32 %v754, %v770
          %v773 = vperm.slane %v740, 0
          %v775 = vmul.f32 %v771, %v773
          %v777 = vperm.slane %v741, 0
          %v779 = vadd.f32 %v775, %v777
          %v780 = vpack.c.bf16 %v779, %v779
          %v781 = vld [vmem:[%s5] sm:$0xf]
          %v782 = vld [vmem:[%s5 + $0x4] sm:$0xf]
          %v783 = vld [vmem:[%s5 + $0x8] sm:$0xf]
          %v784 = vld [vmem:[%s5 + $0xc] sm:$0xf]
          %v785 = vld [vmem:[#allocation11] sm:$0x1]
          %v787 = vperm.slane %v785, 0
          %v793 = vunpack.c.l.b16 %v781
          %v794 = vunpack.c.l.b16 %v782
          %v795 = vunpack.c.l.b16 %v783
          %v796 = vunpack.c.l.b16 %v784
          %v797 = vpack.c.b16 %v794, %v793
          %v798 = vpack.c.b16 %v796, %v795
          %v802 = vsel %vm742, %v780, 0
          %804 = vmatpush.bf16.msra.mxu0 0
          %805 = vmatpush.bf16.msra.mxu0 0
          %806 = vmatpush.bf16.msra.mxu0 0
          %807 = vmatpush.bf16.msra.mxu0 0
          %808 = vmatpush.bf16.msra.mxu0 0
          %809 = vmatpush.bf16.msra.mxu0 0
          %810 = vmatpush.bf16.msra.mxu0 %v798
          %811 = vmatpush.bf16.msra.mxu0 %v797
          %812 = vmatmul.bf16.gmra.mxu0 %v802
          %v813 = vpop.f32.mrf.mxu0
          %v814 = vadd.f32 %v787, %v813
          %v815 = vpop.f32.mrf.mxu0
          %816 = vdwg.mxu0
          %v817 = vld [vmem:[%s6] sm:$0xf]
          %v818 = vld [vmem:[%s6 + $0x4] sm:$0xf]
          %v819 = vld [vmem:[%s6 + $0x8] sm:$0xf]
          %v820 = vld [vmem:[%s6 + $0xc] sm:$0xf]
          %v821 = vld [vmem:[#allocation13] sm:$0x1]
          %v823 = vperm.slane %v821, 0
          %v829 = vunpack.c.l.b16 %v817
          %v830 = vunpack.c.l.b16 %v818
          %v831 = vunpack.c.l.b16 %v819
          %v832 = vunpack.c.l.b16 %v820
          %v833 = vpack.c.b16 %v830, %v829
          %v834 = vpack.c.b16 %v832, %v831
          %837 = vmatpush.bf16.msra.mxu0 0
          %838 = vmatpush.bf16.msra.mxu0 0
          %839 = vmatpush.bf16.msra.mxu0 0
          %840 = vmatpush.bf16.msra.mxu0 0
          %841 = vmatpush.bf16.msra.mxu0 0
          %842 = vmatpush.bf16.msra.mxu0 0
          %843 = vmatpush.bf16.msra.mxu0 %v834
          %844 = vmatpush.bf16.msra.mxu0 %v833
          %845 = vmatmul.bf16.gmra.mxu0 %v802
          %v846 = vpop.f32.mrf.mxu0
          %v847 = vadd.f32 %v823, %v846
          %v848 = vpop.f32.mrf.mxu0
          %849 = vdwg.mxu0
          %851 = vrot.lane.b32.xlu0 %v814, 120
          %v852 = vpop.permute.xlu0 %851
          %854 = vrot.lane.b32.xlu0 %v814, 112
          %v855 = vpop.permute.xlu0 %854
          %857 = vrot.lane.b32.xlu0 %v814, 104
          %v858 = vpop.permute.xlu0 %857
          %v860 = vrot.slane %v855, 4
          %vm861 = vcmask 1047556
          %v862 = vsel %vm861, %v860, %v814
          %v863 = vrot.slane %v814, 4
          %v864 = vsel %vm861, %v855, %v863
          %v866 = vunpack.c.l.s4 1983009808
          %v867 = vunpack.c.0.s8 %v866
          %v868 = vperm.slane %v862, %v867
          %v870 = vunpack.c.l.s4 1983009808
          %v871 = vunpack.c.0.s8 %v870
          %v872 = vperm.slane %v864, %v871
          %v873 = vrot.slane %v858, 4
          %v874 = vsel %vm861, %v873, %v852
          %v875 = vrot.slane %v852, 4
          %v876 = vsel %vm861, %v858, %v875
          %v878 = vunpack.c.l.s4 1983009808
          %v879 = vunpack.c.0.s8 %v878
          %v880 = vperm.slane %v874, %v879
          %v882 = vunpack.c.l.s4 1983009808
          %v883 = vunpack.c.0.s8 %v882
          %v884 = vperm.slane %v876, %v883
          %v885 = vrot.slane %v880, 4
          %v886 = vsel %vm861, %v885, %v868
          %v887 = vrot.slane %v868, 4
          %v888 = vsel %vm861, %v880, %v887
          %v890 = vunpack.c.l.s4 1934713408
          %v891 = vunpack.c.0.s8 %v890
          %v892 = vperm.slane %v886, %v891
          %v894 = vunpack.c.l.s4 1934713408
          %v895 = vunpack.c.0.s8 %v894
          %v896 = vperm.slane %v888, %v895
          %v897 = vrot.slane %v884, 4
          %v898 = vsel %vm861, %v897, %v872
          %v899 = vrot.slane %v872, 4
          %v900 = vsel %vm861, %v884, %v899
          %v902 = vunpack.c.l.s4 1934713408
          %v903 = vunpack.c.0.s8 %v902
          %v904 = vperm.slane %v898, %v903
          %v906 = vunpack.c.l.s4 1934713408
          %v907 = vunpack.c.0.s8 %v906
          %v908 = vperm.slane %v900, %v907
          %v909 = vrot.slane %v892, 4
          %v910 = vsel %vm861, 0.0, %v909
          %v911 = vrot.slane %v896, 4
          %v912 = vsel %vm861, 0.0, %v911
          %v913 = vrot.slane %v904, 4
          %v914 = vsel %vm861, 0.0, %v913
          %v915 = vrot.slane %v908, 4
          %v916 = vsel %vm861, 0.0, %v915
          %v917 = vsel %vm861, %v911, %v892
          %v919 = vunpack.c.l.s4 1983009808
          %v920 = vunpack.c.0.s8 %v919
          %v921 = vperm.slane %v917, %v920
          %v922 = vrot.slane %v912, 4
          %v923 = vsel %vm861, %v922, %v910
          %v925 = vunpack.c.l.s4 1983009808
          %v926 = vunpack.c.0.s8 %v925
          %v927 = vperm.slane %v923, %v926
          %v928 = vsel %vm861, %v915, %v904
          %v930 = vunpack.c.l.s4 1983009808
          %v931 = vunpack.c.0.s8 %v930
          %v932 = vperm.slane %v928, %v931
          %v933 = vrot.slane %v916, 4
          %v934 = vsel %vm861, %v933, %v914
          %v936 = vunpack.c.l.s4 1983009808
          %v937 = vunpack.c.0.s8 %v936
          %v938 = vperm.slane %v934, %v937
          %v939 = vrot.slane %v927, 4
          %v940 = vsel %vm861, %v939, %v921
          %v941 = vrot.slane %v921, 4
          %v942 = vsel %vm861, %v927, %v941
          %v944 = vunpack.c.l.s4 1934713408
          %v945 = vunpack.c.0.s8 %v944
          %v946 = vperm.slane %v940, %v945
          %v948 = vunpack.c.l.s4 1934713408
          %v949 = vunpack.c.0.s8 %v948
          %v950 = vperm.slane %v942, %v949
          %v951 = vrot.slane %v938, 4
          %v952 = vsel %vm861, %v951, %v932
          %v953 = vrot.slane %v932, 4
          %v954 = vsel %vm861, %v938, %v953
          %v956 = vunpack.c.l.s4 1934713408
          %v957 = vunpack.c.0.s8 %v956
          %v958 = vperm.slane %v952, %v957
          %v960 = vunpack.c.l.s4 1934713408
          %v961 = vunpack.c.0.s8 %v960
          %v962 = vperm.slane %v954, %v961
          %v963 = vrot.slane %v958, 4
          %v964 = vsel %vm861, %v963, %v946
          %v965 = vrot.slane %v946, 4
          %v966 = vsel %vm861, %v958, %v965
          %v967 = vrot.slane %v962, 4
          %v968 = vsel %vm861, %v967, %v950
          %v969 = vrot.slane %v950, 4
          %v970 = vsel %vm861, %v962, %v969
          %v971 = vpack.c.bf16 %v964, %v964
          %v972 = vpack.c.bf16 %v966, %v966
          %v973 = vpack.c.bf16 %v968, %v968
          %v974 = vpack.c.bf16 %v970, %v970
          %vm975 = vcmask 60416
          %976 = vst.msk [vmem:[#allocation2] sm:$0xf] %vm975, %v971
          %977 = vst.msk [vmem:[#allocation2 + $0x4] sm:$0xf] %vm975, %v972
          %978 = vst.msk [vmem:[#allocation2 + $0x8] sm:$0xf] %vm975, %v973
          %979 = vst.msk [vmem:[#allocation2 + $0xc] sm:$0xf] %vm975, %v974
          %981 = vrot.lane.b32.xlu0 %v847, 120
          %v982 = vpop.permute.xlu0 %981
          %984 = vrot.lane.b32.xlu0 %v847, 112
          %v985 = vpop.permute.xlu0 %984
          %987 = vrot.lane.b32.xlu0 %v847, 104
          %v988 = vpop.permute.xlu0 %987
          %v990 = vrot.slane %v985, 4
          %v991 = vsel %vm861, %v990, %v847
          %v992 = vrot.slane %v847, 4
          %v993 = vsel %vm861, %v985, %v992
          %v995 = vunpack.c.l.s4 1983009808
          %v996 = vunpack.c.0.s8 %v995
          %v997 = vperm.slane %v991, %v996
          %v999 = vunpack.c.l.s4 1983009808
          %v1000 = vunpack.c.0.s8 %v999
          %v1001 = vperm.slane %v993, %v1000
          %v1002 = vrot.slane %v988, 4
          %v1003 = vsel %vm861, %v1002, %v982
          %v1004 = vrot.slane %v982, 4
          %v1005 = vsel %vm861, %v988, %v1004
          %v1007 = vunpack.c.l.s4 1983009808
          %v1008 = vunpack.c.0.s8 %v1007
          %v1009 = vperm.slane %v1003, %v1008
          %v1011 = vunpack.c.l.s4 1983009808
          %v1012 = vunpack.c.0.s8 %v1011
          %v1013 = vperm.slane %v1005, %v1012
          %v1014 = vrot.slane %v1009, 4
          %v1015 = vsel %vm861, %v1014, %v997
          %v1016 = vrot.slane %v997, 4
          %v1017 = vsel %vm861, %v1009, %v1016
          %v1019 = vunpack.c.l.s4 1934713408
          %v1020 = vunpack.c.0.s8 %v1019
          %v1021 = vperm.slane %v1015, %v1020
          %v1023 = vunpack.c.l.s4 1934713408
          %v1024 = vunpack.c.0.s8 %v1023
          %v1025 = vperm.slane %v1017, %v1024
          %v1026 = vrot.slane %v1013, 4
          %v1027 = vsel %vm861, %v1026, %v1001
          %v1028 = vrot.slane %v1001, 4
          %v1029 = vsel %vm861, %v1013, %v1028
          %v1031 = vunpack.c.l.s4 1934713408
          %v1032 = vunpack.c.0.s8 %v1031
          %v1033 = vperm.slane %v1027, %v1032
          %v1035 = vunpack.c.l.s4 1934713408
          %v1036 = vunpack.c.0.s8 %v1035
          %v1037 = vperm.slane %v1029, %v1036
          %v1038 = vrot.slane %v1021, 4
          %v1039 = vsel %vm861, 0.0, %v1038
          %v1040 = vrot.slane %v1025, 4
          %v1041 = vsel %vm861, 0.0, %v1040
          %v1042 = vrot.slane %v1033, 4
          %v1043 = vsel %vm861, 0.0, %v1042
          %v1044 = vrot.slane %v1037, 4
          %v1045 = vsel %vm861, 0.0, %v1044
          %v1046 = vsel %vm861, %v1040, %v1021
          %v1048 = vunpack.c.l.s4 1983009808
          %v1049 = vunpack.c.0.s8 %v1048
          %v1050 = vperm.slane %v1046, %v1049
          %v1051 = vrot.slane %v1041, 4
          %v1052 = vsel %vm861, %v1051, %v1039
          %v1054 = vunpack.c.l.s4 1983009808
          %v1055 = vunpack.c.0.s8 %v1054
          %v1056 = vperm.slane %v1052, %v1055
          %v1057 = vsel %vm861, %v1044, %v1033
          %v1059 = vunpack.c.l.s4 1983009808
          %v1060 = vunpack.c.0.s8 %v1059
          %v1061 = vperm.slane %v1057, %v1060
          %v1062 = vrot.slane %v1045, 4
          %v1063 = vsel %vm861, %v1062, %v1043
          %v1065 = vunpack.c.l.s4 1983009808
          %v1066 = vunpack.c.0.s8 %v1065
          %v1067 = vperm.slane %v1063, %v1066
          %v1068 = vrot.slane %v1056, 4
          %v1069 = vsel %vm861, %v1068, %v1050
          %v1070 = vrot.slane %v1050, 4
          %v1071 = vsel %vm861, %v1056, %v1070
          %v1073 = vunpack.c.l.s4 1934713408
          %v1074 = vunpack.c.0.s8 %v1073
          %v1075 = vperm.slane %v1069, %v1074
          %v1077 = vunpack.c.l.s4 1934713408
          %v1078 = vunpack.c.0.s8 %v1077
          %v1079 = vperm.slane %v1071, %v1078
          %v1080 = vrot.slane %v1067, 4
          %v1081 = vsel %vm861, %v1080, %v1061
          %v1082 = vrot.slane %v1061, 4
          %v1083 = vsel %vm861, %v1067, %v1082
          %v1085 = vunpack.c.l.s4 1934713408
          %v1086 = vunpack.c.0.s8 %v1085
          %v1087 = vperm.slane %v1081, %v1086
          %v1089 = vunpack.c.l.s4 1934713408
          %v1090 = vunpack.c.0.s8 %v1089
          %v1091 = vperm.slane %v1083, %v1090
          %v1092 = vrot.slane %v1087, 4
          %v1093 = vsel %vm861, %v1092, %v1075
          %v1094 = vrot.slane %v1075, 4
          %v1095 = vsel %vm861, %v1087, %v1094
          %v1096 = vrot.slane %v1091, 4
          %v1097 = vsel %vm861, %v1096, %v1079
          %v1098 = vrot.slane %v1079, 4
          %v1099 = vsel %vm861, %v1091, %v1098
          %v1100 = vpack.c.bf16 %v1093, %v1093
          %v1101 = vpack.c.bf16 %v1095, %v1095
          %v1102 = vpack.c.bf16 %v1097, %v1097
          %v1103 = vpack.c.bf16 %v1099, %v1099
          %1104 = vst.msk [vmem:[#allocation3] sm:$0xf] %vm975, %v1100
          %1105 = vst.msk [vmem:[#allocation3 + $0x4] sm:$0xf] %vm975, %v1101
          %1106 = vst.msk [vmem:[#allocation3 + $0x8] sm:$0xf] %vm975, %v1102
          %1107 = vst.msk [vmem:[#allocation3 + $0xc] sm:$0xf] %vm975, %v1103
        $region136: #{tpu_custom_call.1} parent=91 // pred_fallthru
          _
        %s1108 = smul.u32 %s44, 8
        %s1109 = scalar_lea.vmem %s733, %s1108
        %v1110 = vld [vmem:[%s1109] sm:$0xff]
        %v1111 = vld [vmem:[#allocation5] sm:$0x1]
        %v1112 = vld [vmem:[#allocation8] sm:$0x1]
        %vm1113 = vcmask 261120
        %v1114 = vsel %vm1113, %v1110, 0.0
        %1115 = vadd.xlane.f32.xlu0 %v1114
        %v1116 = vpop.xlane.xlu0 %1115
        %v1117 = vrcp.pop 32.0
        %v1118 = vmul.f32 32.0, %v1117
        %v1119 = vsub.f32 1.0, %v1118
        %v1120 = vmul.f32 %v1117, %v1119
        %v1121 = vadd.f32 %v1117, %v1120
        %vm1122 = vweird.f32 %v1117
        %v1123 = vsel %vm1122, %v1117, %v1121
        %v1124 = vmul.f32 %v1116, %v1123
        %v1125 = vsub.f32 %v1110, %v1124
        %v1126 = vmul.f32 %v1125, %v1125
        %v1127 = vsel %vm1113, %v1126, 0.0
        %1128 = vadd.xlane.f32.xlu0 %v1127
        %v1129 = vpop.xlane.xlu0 %1128
        %v1130 = vmul.f32 %v1129, %v1123
        %v1131 = vadd.f32 %v1130, 1e-05
        %v1132 = vrsqrt.pop %v1131
        %v1133 = vmul.f32 %v1132, %v1131
        %v1134 = vmul.f32 %v1133, %v1132
        %v1135 = vmul.f32 0.5, %v1134
        %v1136 = vsub.f32 1.5, %v1135
        %v1137 = vmul.f32 %v1132, %v1136
        %vm1138 = vweird.f32 %v1131
        %vm1139 = vweird.f32 %v1132
        %vm1140 = vmor %vm1138, %vm1139
        %v1141 = vsel %vm1140, %v1132, %v1137
        %v1142 = vmul.f32 %v1125, %v1141
        %v1144 = vperm.slane %v1111, 0
        %v1146 = vmul.f32 %v1142, %v1144
        %v1148 = vperm.slane %v1112, 0
        %v1150 = vadd.f32 %v1146, %v1148
        %v1151 = vpack.c.bf16 %v1150, %v1150
        %v1152 = vld [vmem:[%s4] sm:$0xf]
        %v1153 = vld [vmem:[%s4 + $0x4] sm:$0xf]
        %v1154 = vld [vmem:[%s4 + $0x8] sm:$0xf]
        %v1155 = vld [vmem:[%s4 + $0xc] sm:$0xf]
        %v1156 = vld [vmem:[#allocation10] sm:$0x1]
        %v1158 = vperm.slane %v1156, 0
        %v1164 = vunpack.c.l.b16 %v1152
        %v1165 = vunpack.c.l.b16 %v1153
        %v1166 = vunpack.c.l.b16 %v1154
        %v1167 = vunpack.c.l.b16 %v1155
        %v1168 = vpack.c.b16 %v1165, %v1164
        %v1169 = vpack.c.b16 %v1167, %v1166
        %v1173 = vsel %vm1113, %v1151, 0
        %1175 = vmatpush.bf16.msra.mxu0 0
        %1176 = vmatpush.bf16.msra.mxu0 0
        %1177 = vmatpush.bf16.msra.mxu0 0
        %1178 = vmatpush.bf16.msra.mxu0 0
        %1179 = vmatpush.bf16.msra.mxu0 0
        %1180 = vmatpush.bf16.msra.mxu0 0
        %1181 = vmatpush.bf16.msra.mxu0 %v1169
        %1182 = vmatpush.bf16.msra.mxu0 %v1168
        %1183 = vmatmul.bf16.gmra.mxu0 %v1173
        %v1184 = vpop.f32.mrf.mxu0
        %v1185 = vadd.f32 %v1158, %v1184
        %v1186 = vpop.f32.mrf.mxu0
        %1187 = vdwg.mxu0
        %1189 = vrot.lane.b32.xlu0 %v1185, 120
        %v1190 = vpop.permute.xlu0 %1189
        %1192 = vrot.lane.b32.xlu0 %v1185, 112
        %v1193 = vpop.permute.xlu0 %1192
        %1195 = vrot.lane.b32.xlu0 %v1185, 104
        %v1196 = vpop.permute.xlu0 %1195
        %v1198 = vrot.slane %v1193, 4
        %vm1199 = vcmask 1047556
        %v1200 = vsel %vm1199, %v1198, %v1185
        %v1201 = vrot.slane %v1185, 4
        %v1202 = vsel %vm1199, %v1193, %v1201
        %v1204 = vunpack.c.l.s4 1983009808
        %v1205 = vunpack.c.0.s8 %v1204
        %v1206 = vperm.slane %v1200, %v1205
        %v1208 = vunpack.c.l.s4 1983009808
        %v1209 = vunpack.c.0.s8 %v1208
        %v1210 = vperm.slane %v1202, %v1209
        %v1211 = vrot.slane %v1196, 4
        %v1212 = vsel %vm1199, %v1211, %v1190
        %v1213 = vrot.slane %v1190, 4
        %v1214 = vsel %vm1199, %v1196, %v1213
        %v1216 = vunpack.c.l.s4 1983009808
        %v1217 = vunpack.c.0.s8 %v1216
        %v1218 = vperm.slane %v1212, %v1217
        %v1220 = vunpack.c.l.s4 1983009808
        %v1221 = vunpack.c.0.s8 %v1220
        %v1222 = vperm.slane %v1214, %v1221
        %v1223 = vrot.slane %v1218, 4
        %v1224 = vsel %vm1199, %v1223, %v1206
        %v1225 = vrot.slane %v1206, 4
        %v1226 = vsel %vm1199, %v1218, %v1225
        %v1228 = vunpack.c.l.s4 1934713408
        %v1229 = vunpack.c.0.s8 %v1228
        %v1230 = vperm.slane %v1224, %v1229
        %v1232 = vunpack.c.l.s4 1934713408
        %v1233 = vunpack.c.0.s8 %v1232
        %v1234 = vperm.slane %v1226, %v1233
        %v1235 = vrot.slane %v1222, 4
        %v1236 = vsel %vm1199, %v1235, %v1210
        %v1237 = vrot.slane %v1210, 4
        %v1238 = vsel %vm1199, %v1222, %v1237
        %v1240 = vunpack.c.l.s4 1934713408
        %v1241 = vunpack.c.0.s8 %v1240
        %v1242 = vperm.slane %v1236, %v1241
        %v1244 = vunpack.c.l.s4 1934713408
        %v1245 = vunpack.c.0.s8 %v1244
        %v1246 = vperm.slane %v1238, %v1245
        %v1247 = vrot.slane %v1230, 4
        %v1248 = vsel %vm1199, 0.0, %v1247
        %v1249 = vrot.slane %v1234, 4
        %v1250 = vsel %vm1199, 0.0, %v1249
        %v1251 = vrot.slane %v1242, 4
        %v1252 = vsel %vm1199, 0.0, %v1251
        %v1253 = vrot.slane %v1246, 4
        %v1254 = vsel %vm1199, 0.0, %v1253
        %v1255 = vsel %vm1199, %v1249, %v1230
        %v1257 = vunpack.c.l.s4 1983009808
        %v1258 = vunpack.c.0.s8 %v1257
        %v1259 = vperm.slane %v1255, %v1258
        %v1260 = vrot.slane %v1250, 4
        %v1261 = vsel %vm1199, %v1260, %v1248
        %v1263 = vunpack.c.l.s4 1983009808
        %v1264 = vunpack.c.0.s8 %v1263
        %v1265 = vperm.slane %v1261, %v1264
        %v1266 = vsel %vm1199, %v1253, %v1242
        %v1268 = vunpack.c.l.s4 1983009808
        %v1269 = vunpack.c.0.s8 %v1268
        %v1270 = vperm.slane %v1266, %v1269
        %v1271 = vrot.slane %v1254, 4
        %v1272 = vsel %vm1199, %v1271, %v1252
        %v1274 = vunpack.c.l.s4 1983009808
        %v1275 = vunpack.c.0.s8 %v1274
        %v1276 = vperm.slane %v1272, %v1275
        %v1277 = vrot.slane %v1265, 4
        %v1278 = vsel %vm1199, %v1277, %v1259
        %v1279 = vrot.slane %v1259, 4
        %v1280 = vsel %vm1199, %v1265, %v1279
        %v1282 = vunpack.c.l.s4 1934713408
        %v1283 = vunpack.c.0.s8 %v1282
        %v1284 = vperm.slane %v1278, %v1283
        %v1286 = vunpack.c.l.s4 1934713408
        %v1287 = vunpack.c.0.s8 %v1286
        %v1288 = vperm.slane %v1280, %v1287
        %v1289 = vrot.slane %v1276, 4
        %v1290 = vsel %vm1199, %v1289, %v1270
        %v1291 = vrot.slane %v1270, 4
        %v1292 = vsel %vm1199, %v1276, %v1291
        %v1294 = vunpack.c.l.s4 1934713408
        %v1295 = vunpack.c.0.s8 %v1294
        %v1296 = vperm.slane %v1290, %v1295
        %v1298 = vunpack.c.l.s4 1934713408
        %v1299 = vunpack.c.0.s8 %v1298
        %v1300 = vperm.slane %v1292, %v1299
        %v1301 = vrot.slane %v1296, 4
        %v1302 = vsel %vm1199, %v1301, %v1284
        %v1303 = vrot.slane %v1284, 4
        %v1304 = vsel %vm1199, %v1296, %v1303
        %v1305 = vrot.slane %v1300, 4
        %v1306 = vsel %vm1199, %v1305, %v1288
        %v1307 = vrot.slane %v1288, 4
        %v1308 = vsel %vm1199, %v1300, %v1307
        %v1309 = vpack.c.bf16 %v1302, %v1302
        %v1310 = vpack.c.bf16 %v1304, %v1304
        %v1311 = vpack.c.bf16 %v1306, %v1306
        %v1312 = vpack.c.bf16 %v1308, %v1308
        %v1313 = vld [vmem:[#allocation2] sm:$0xf]
        %v1314 = vld [vmem:[#allocation2 + $0x4] sm:$0xf]
        %v1315 = vld [vmem:[#allocation2 + $0x8] sm:$0xf]
        %v1316 = vld [vmem:[#allocation2 + $0xc] sm:$0xf]
        %vm1317 = vcmask 64512
        %v1319 = vsel %vm1317, %v1309, 0
        %v1322 = vsel %vm1317, %v1313, 0
        %1324 = vmatpush.bf16.xpose.msra.mxu0 0
        %1325 = vmatpush.bf16.xpose.msra.mxu0 0
        %1326 = vmatpush.bf16.xpose.msra.mxu0 0
        %1327 = vmatpush.bf16.xpose.msra.mxu0 0
        %1328 = vmatpush.bf16.xpose.msra.mxu0 0
        %1329 = vmatpush.bf16.xpose.msra.mxu0 0
        %1330 = vmatpush.bf16.xpose.msra.mxu0 0
        %1331 = vmatpush.bf16.xpose.msra.mxu0 %v1322
        %1332 = vmatmul.bf16.gmra.mxu0 %v1319
        %v1333 = vpop.f32.mrf.mxu0
        %v1334 = vadd.f32 0.0, %v1333
        %v1335 = vpop.f32.mrf.mxu0
        %1336 = vdwg.mxu0
        %v1338 = vsel %vm1317, %v1310, 0
        %v1341 = vsel %vm1317, %v1314, 0
        %1343 = vmatpush.bf16.xpose.msra.mxu0 0
        %1344 = vmatpush.bf16.xpose.msra.mxu0 0
        %1345 = vmatpush.bf16.xpose.msra.mxu0 0
        %1346 = vmatpush.bf16.xpose.msra.mxu0 0
        %1347 = vmatpush.bf16.xpose.msra.mxu0 0
        %1348 = vmatpush.bf16.xpose.msra.mxu0 0
        %1349 = vmatpush.bf16.xpose.msra.mxu0 0
        %1350 = vmatpush.bf16.xpose.msra.mxu0 %v1341
        %1351 = vmatmul.bf16.gmra.mxu0 %v1338
        %v1352 = vpop.f32.mrf.mxu0
        %v1353 = vadd.f32 0.0, %v1352
        %v1354 = vpop.f32.mrf.mxu0
        %1355 = vdwg.mxu0
        %v1357 = vsel %vm1317, %v1311, 0
        %v1360 = vsel %vm1317, %v1315, 0
        %1362 = vmatpush.bf16.xpose.msra.mxu0 0
        %1363 = vmatpush.bf16.xpose.msra.mxu0 0
        %1364 = vmatpush.bf16.xpose.msra.mxu0 0
        %1365 = vmatpush.bf16.xpose.msra.mxu0 0
        %1366 = vmatpush.bf16.xpose.msra.mxu0 0
        %1367 = vmatpush.bf16.xpose.msra.mxu0 0
        %1368 = vmatpush.bf16.xpose.msra.mxu0 0
        %1369 = vmatpush.bf16.xpose.msra.mxu0 %v1360
        %1370 = vmatmul.bf16.gmra.mxu0 %v1357
        %v1371 = vpop.f32.mrf.mxu0
        %v1372 = vadd.f32 0.0, %v1371
        %v1373 = vpop.f32.mrf.mxu0
        %1374 = vdwg.mxu0
        %v1376 = vsel %vm1317, %v1312, 0
        %v1379 = vsel %vm1317, %v1316, 0
        %1381 = vmatpush.bf16.xpose.msra.mxu0 0
        %1382 = vmatpush.bf16.xpose.msra.mxu0 0
        %1383 = vmatpush.bf16.xpose.msra.mxu0 0
        %1384 = vmatpush.bf16.xpose.msra.mxu0 0
        %1385 = vmatpush.bf16.xpose.msra.mxu0 0
        %1386 = vmatpush.bf16.xpose.msra.mxu0 0
        %1387 = vmatpush.bf16.xpose.msra.mxu0 0
        %1388 = vmatpush.bf16.xpose.msra.mxu0 %v1379
        %1389 = vmatmul.bf16.gmra.mxu0 %v1376
        %v1390 = vpop.f32.mrf.mxu0
        %v1391 = vadd.f32 0.0, %v1390
        %v1392 = vpop.f32.mrf.mxu0
        %1393 = vdwg.mxu0
        %v1394 = vsel %vm1317, %v1334, -inf
        %1395 = vmax.xlane.f32.xlu0 %v1394
        %v1396 = vpop.xlane.xlu0 %1395
        %v1397 = vsel %vm1317, %v1353, -inf
        %1398 = vmax.xlane.f32.xlu0 %v1397
        %v1399 = vpop.xlane.xlu0 %1398
        %v1400 = vsel %vm1317, %v1372, -inf
        %1401 = vmax.xlane.f32.xlu0 %v1400
        %v1402 = vpop.xlane.xlu0 %1401
        %v1403 = vsel %vm1317, %v1391, -inf
        %1404 = vmax.xlane.f32.xlu0 %v1403
        %v1405 = vpop.xlane.xlu0 %1404
        %v1406 = vsub.f32 %v1334, %v1396
        %v1407 = vsub.f32 %v1353, %v1399
        %v1408 = vsub.f32 %v1372, %v1402
        %v1409 = vsub.f32 %v1391, %v1405
        %v1410 = vpow.pop %v1406
        %v1411 = vpow.pop %v1407
        %v1412 = vpow.pop %v1408
        %v1413 = vpow.pop %v1409
        %v1414 = vsel %vm1317, %v1410, 0.0
        %1415 = vadd.xlane.f32.xlu0 %v1414
        %v1416 = vpop.xlane.xlu0 %1415
        %v1417 = vsel %vm1317, %v1411, 0.0
        %1418 = vadd.xlane.f32.xlu0 %v1417
        %v1419 = vpop.xlane.xlu0 %1418
        %v1420 = vsel %vm1317, %v1412, 0.0
        %1421 = vadd.xlane.f32.xlu0 %v1420
        %v1422 = vpop.xlane.xlu0 %1421
        %v1423 = vsel %vm1317, %v1413, 0.0
        %1424 = vadd.xlane.f32.xlu0 %v1423
        %v1425 = vpop.xlane.xlu0 %1424
        %v1426 = vpack.c.bf16 %v1410, %v1410
        %v1427 = vpack.c.bf16 %v1411, %v1411
        %v1428 = vpack.c.bf16 %v1412, %v1412
        %v1429 = vpack.c.bf16 %v1413, %v1413
        %v1430 = vld [vmem:[#allocation3] sm:$0xf]
        %v1431 = vld [vmem:[#allocation3 + $0x4] sm:$0xf]
        %v1432 = vld [vmem:[#allocation3 + $0x8] sm:$0xf]
        %v1433 = vld [vmem:[#allocation3 + $0xc] sm:$0xf]
        %v1435 = vsel %vm1317, %v1426, 0
        %vm1437 = vcmask 1043456
        %v1439 = vsel %vm1437, %v1430, 0
        %1441 = vmatpush.bf16.msra.mxu0 0
        %1442 = vmatpush.bf16.msra.mxu0 0
        %1443 = vmatpush.bf16.msra.mxu0 0
        %1444 = vmatpush.bf16.msra.mxu0 0
        %1445 = vmatpush.bf16.msra.mxu0 0
        %1446 = vmatpush.bf16.msra.mxu0 0
        %1447 = vmatpush.bf16.msra.mxu0 0
        %1448 = vmatpush.bf16.msra.mxu0 %v1439
        %1449 = vmatmul.bf16.gmra.mxu0 %v1435
        %v1450 = vpop.f32.mrf.mxu0
        %v1451 = vadd.f32 0.0, %v1450
        %v1452 = vpop.f32.mrf.mxu0
        %1453 = vdwg.mxu0
        %v1455 = vsel %vm1317, %v1427, 0
        %v1458 = vsel %vm1437, %v1431, 0
        %1460 = vmatpush.bf16.msra.mxu0 0
        %1461 = vmatpush.bf16.msra.mxu0 0
        %1462 = vmatpush.bf16.msra.mxu0 0
        %1463 = vmatpush.bf16.msra.mxu0 0
        %1464 = vmatpush.bf16.msra.mxu0 0
        %1465 = vmatpush.bf16.msra.mxu0 0
        %1466 = vmatpush.bf16.msra.mxu0 0
        %1467 = vmatpush.bf16.msra.mxu0 %v1458
        %1468 = vmatmul.bf16.gmra.mxu0 %v1455
        %v1469 = vpop.f32.mrf.mxu0
        %v1470 = vadd.f32 0.0, %v1469
        %v1471 = vpop.f32.mrf.mxu0
        %1472 = vdwg.mxu0
        %v1474 = vsel %vm1317, %v1428, 0
        %v1477 = vsel %vm1437, %v1432, 0
        %1479 = vmatpush.bf16.msra.mxu0 0
        %1480 = vmatpush.bf16.msra.mxu0 0
        %1481 = vmatpush.bf16.msra.mxu0 0
        %1482 = vmatpush.bf16.msra.mxu0 0
        %1483 = vmatpush.bf16.msra.mxu0 0
        %1484 = vmatpush.bf16.msra.mxu0 0
        %1485 = vmatpush.bf16.msra.mxu0 0
        %1486 = vmatpush.bf16.msra.mxu0 %v1477
        %1487 = vmatmul.bf16.gmra.mxu0 %v1474
        %v1488 = vpop.f32.mrf.mxu0
        %v1489 = vadd.f32 0.0, %v1488
        %v1490 = vpop.f32.mrf.mxu0
        %1491 = vdwg.mxu0
        %v1493 = vsel %vm1317, %v1429, 0
        %v1496 = vsel %vm1437, %v1433, 0
        %1498 = vmatpush.bf16.msra.mxu0 0
        %1499 = vmatpush.bf16.msra.mxu0 0
        %1500 = vmatpush.bf16.msra.mxu0 0
        %1501 = vmatpush.bf16.msra.mxu0 0
        %1502 = vmatpush.bf16.msra.mxu0 0
        %1503 = vmatpush.bf16.msra.mxu0 0
        %1504 = vmatpush.bf16.msra.mxu0 0
        %1505 = vmatpush.bf16.msra.mxu0 %v1496
        %1506 = vmatmul.bf16.gmra.mxu0 %v1493
        %v1507 = vpop.f32.mrf.mxu0
        %v1508 = vadd.f32 0.0, %v1507
        %v1509 = vpop.f32.mrf.mxu0
        %1510 = vdwg.mxu0
        %v1511 = vrcp.pop %v1416
        %v1512 = vrcp.pop %v1419
        %v1513 = vrcp.pop %v1422
        %v1514 = vrcp.pop %v1425
        %v1515 = vmul.f32 %v1451, %v1511
        %v1516 = vmul.f32 %v1470, %v1512
        %v1517 = vmul.f32 %v1489, %v1513
        %v1518 = vmul.f32 %v1508, %v1514
        %v1519 = vrot.slane %v1517, 4
        %v1520 = vsel %vm1199, %v1519, %v1515
        %v1521 = vrot.slane %v1515, 4
        %v1522 = vsel %vm1199, %v1517, %v1521
        %v1524 = vunpack.c.l.s4 1983009808
        %v1525 = vunpack.c.0.s8 %v1524
        %v1526 = vperm.slane %v1520, %v1525
        %v1528 = vunpack.c.l.s4 1983009808
        %v1529 = vunpack.c.0.s8 %v1528
        %v1530 = vperm.slane %v1522, %v1529
        %v1531 = vrot.slane %v1518, 4
        %v1532 = vsel %vm1199, %v1531, %v1516
        %v1533 = vrot.slane %v1516, 4
        %v1534 = vsel %vm1199, %v1518, %v1533
        %v1536 = vunpack.c.l.s4 1983009808
        %v1537 = vunpack.c.0.s8 %v1536
        %v1538 = vperm.slane %v1532, %v1537
        %v1540 = vunpack.c.l.s4 1983009808
        %v1541 = vunpack.c.0.s8 %v1540
        %v1542 = vperm.slane %v1534, %v1541
        %v1543 = vrot.slane %v1538, 4
        %v1544 = vsel %vm1199, %v1543, %v1526
        %v1545 = vrot.slane %v1526, 4
        %v1546 = vsel %vm1199, %v1538, %v1545
        %v1548 = vunpack.c.l.s4 1934713408
        %v1549 = vunpack.c.0.s8 %v1548
        %v1550 = vperm.slane %v1544, %v1549
        %v1552 = vunpack.c.l.s4 1934713408
        %v1553 = vunpack.c.0.s8 %v1552
        %v1554 = vperm.slane %v1546, %v1553
        %v1555 = vrot.slane %v1542, 4
        %v1556 = vsel %vm1199, %v1555, %v1530
        %v1557 = vrot.slane %v1530, 4
        %v1558 = vsel %vm1199, %v1542, %v1557
        %v1560 = vunpack.c.l.s4 1934713408
        %v1561 = vunpack.c.0.s8 %v1560
        %v1562 = vperm.slane %v1556, %v1561
        %v1564 = vunpack.c.l.s4 1934713408
        %v1565 = vunpack.c.0.s8 %v1564
        %v1566 = vperm.slane %v1558, %v1565
        %v1567 = vrot.slane %v1550, 4
        %v1568 = vsel %vm1199, 0.0, %v1567
        %v1569 = vrot.slane %v1554, 4
        %v1570 = vsel %vm1199, 0.0, %v1569
        %v1571 = vrot.slane %v1562, 4
        %v1572 = vsel %vm1199, 0.0, %v1571
        %v1573 = vrot.slane %v1566, 4
        %v1574 = vsel %vm1199, 0.0, %v1573
        %v1575 = vsel %vm1199, %v1569, %v1550
        %v1577 = vunpack.c.l.s4 1983009808
        %v1578 = vunpack.c.0.s8 %v1577
        %v1579 = vperm.slane %v1575, %v1578
        %v1580 = vrot.slane %v1570, 4
        %v1581 = vsel %vm1199, %v1580, %v1568
        %v1583 = vunpack.c.l.s4 1983009808
        %v1584 = vunpack.c.0.s8 %v1583
        %v1585 = vperm.slane %v1581, %v1584
        %v1586 = vsel %vm1199, %v1573, %v1562
        %v1588 = vunpack.c.l.s4 1983009808
        %v1589 = vunpack.c.0.s8 %v1588
        %v1590 = vperm.slane %v1586, %v1589
        %v1591 = vrot.slane %v1574, 4
        %v1592 = vsel %vm1199, %v1591, %v1572
        %v1594 = vunpack.c.l.s4 1983009808
        %v1595 = vunpack.c.0.s8 %v1594
        %v1596 = vperm.slane %v1592, %v1595
        %v1597 = vrot.slane %v1585, 4
        %v1598 = vsel %vm1199, %v1597, %v1579
        %v1599 = vrot.slane %v1579, 4
        %v1600 = vsel %vm1199, %v1585, %v1599
        %v1602 = vunpack.c.l.s4 1934713408
        %v1603 = vunpack.c.0.s8 %v1602
        %v1604 = vperm.slane %v1598, %v1603
        %v1606 = vunpack.c.l.s4 1934713408
        %v1607 = vunpack.c.0.s8 %v1606
        %v1608 = vperm.slane %v1600, %v1607
        %v1609 = vrot.slane %v1596, 4
        %v1610 = vsel %vm1199, %v1609, %v1590
        %v1611 = vrot.slane %v1590, 4
        %v1612 = vsel %vm1199, %v1596, %v1611
        %v1614 = vunpack.c.l.s4 1934713408
        %v1615 = vunpack.c.0.s8 %v1614
        %v1616 = vperm.slane %v1610, %v1615
        %v1618 = vunpack.c.l.s4 1934713408
        %v1619 = vunpack.c.0.s8 %v1618
        %v1620 = vperm.slane %v1612, %v1619
        %v1621 = vrot.slane %v1616, 4
        %v1622 = vsel %vm1199, %v1621, %v1604
        %v1623 = vrot.slane %v1604, 4
        %v1624 = vsel %vm1199, %v1616, %v1623
        %v1625 = vrot.slane %v1620, 4
        %v1626 = vsel %vm1199, %v1625, %v1608
        %v1627 = vrot.slane %v1608, 4
        %v1628 = vsel %vm1199, %v1620, %v1627
        %1630 = vrot.lane.b32.xlu0 %v1624, 8
        %v1631 = vpop.permute.xlu0 %1630
        %1634 = vrot.lane.b32.xlu0 %v1626, 16
        %v1635 = vpop.permute.xlu0 %1634
        %1638 = vrot.lane.b32.xlu0 %v1628, 24
        %v1639 = vpop.permute.xlu0 %1638
        %v1641 = vsel %vm1317, %v1622, %v1631
        %vm1642 = vcmask 130048
        %v1643 = vsel %vm1642, %v1641, %v1635
        %vm1644 = vcmask 195584
        %v1645 = vsel %vm1644, %v1643, %v1639
        %v1646 = vpack.c.bf16 %v1645, %v1645
        %v1647 = vld [vmem:[%s10] sm:$0xf]
        %v1648 = vld [vmem:[%s10 + $0x4] sm:$0xf]
        %v1649 = vld [vmem:[%s10 + $0x8] sm:$0xf]
        %v1650 = vld [vmem:[%s10 + $0xc] sm:$0xf]
        %v1651 = vld [vmem:[#allocation14] sm:$0x1]
        %v1653 = vperm.slane %v1651, 0
        %v1659 = vunpack.c.l.b16 %v1647
        %v1660 = vunpack.c.l.b16 %v1648
        %v1661 = vunpack.c.l.b16 %v1649
        %v1662 = vunpack.c.l.b16 %v1650
        %v1663 = vpack.c.b16 %v1660, %v1659
        %v1664 = vpack.c.b16 %v1662, %v1661
        %v1668 = vsel %vm1113, %v1646, 0
        %1670 = vmatpush.bf16.msra.mxu0 0
        %1671 = vmatpush.bf16.msra.mxu0 0
        %1672 = vmatpush.bf16.msra.mxu0 0
        %1673 = vmatpush.bf16.msra.mxu0 0
        %1674 = vmatpush.bf16.msra.mxu0 0
        %1675 = vmatpush.bf16.msra.mxu0 0
        %1676 = vmatpush.bf16.msra.mxu0 %v1664
        %1677 = vmatpush.bf16.msra.mxu0 %v1663
        %1678 = vmatmul.bf16.gmra.mxu0 %v1668
        %v1679 = vpop.f32.mrf.mxu0
        %v1680 = vadd.f32 %v1653, %v1679
        %v1681 = vpop.f32.mrf.mxu0
        %1682 = vdwg.mxu0
        %v1683 = vadd.f32 %v1110, %v1680
        %v1684 = vld [vmem:[#allocation16] sm:$0x1]
        %v1685 = vld [vmem:[#allocation17] sm:$0x1]
        %v1686 = vsel %vm1113, %v1683, 0.0
        %1687 = vadd.xlane.f32.xlu0 %v1686
        %v1688 = vpop.xlane.xlu0 %1687
        %v1689 = vmul.f32 %v1688, %v1123
        %v1690 = vsub.f32 %v1683, %v1689
        %v1691 = vmul.f32 %v1690, %v1690
        %v1692 = vsel %vm1113, %v1691, 0.0
        %1693 = vadd.xlane.f32.xlu0 %v1692
        %v1694 = vpop.xlane.xlu0 %1693
        %v1695 = vmul.f32 %v1694, %v1123
        %v1696 = vadd.f32 %v1695, 1e-05
        %v1697 = vrsqrt.pop %v1696
        %v1698 = vmul.f32 %v1697, %v1696
        %v1699 = vmul.f32 %v1698, %v1697
        %v1700 = vmul.f32 0.5, %v1699
        %v1701 = vsub.f32 1.5, %v1700
        %v1702 = vmul.f32 %v1697, %v1701
        %vm1703 = vweird.f32 %v1696
        %vm1704 = vweird.f32 %v1697
        %vm1705 = vmor %vm1703, %vm1704
        %v1706 = vsel %vm1705, %v1697, %v1702
        %v1707 = vmul.f32 %v1690, %v1706
        %v1709 = vperm.slane %v1684, 0
        %v1711 = vmul.f32 %v1707, %v1709
        %v1713 = vperm.slane %v1685, 0
        %v1715 = vadd.f32 %v1711, %v1713
        %v1716 = vpack.c.bf16 %v1715, %v1715
        %v1717 = vld [vmem:[#allocation19] sm:$0xf]
        %v1718 = vld [vmem:[#allocation19 + $0x4] sm:$0xf]
        %v1719 = vld [vmem:[#allocation19 + $0x8] sm:$0xf]
        %v1720 = vld [vmem:[#allocation19 + $0xc] sm:$0xf]
        %v1721 = vld [vmem:[#allocation20] sm:$0x1]
        %v1723 = vperm.slane %v1721, 0
        %v1729 = vunpack.c.l.b16 %v1717
        %v1730 = vunpack.c.l.b16 %v1718
        %v1731 = vunpack.c.l.b16 %v1719
        %v1732 = vunpack.c.l.b16 %v1720
        %v1733 = vpack.c.b16 %v1730, %v1729
        %v1734 = vpack.c.b16 %v1732, %v1731
        %v1738 = vsel %vm1113, %v1716, 0
        %1740 = vmatpush.bf16.msra.mxu0 0
        %1741 = vmatpush.bf16.msra.mxu0 0
        %1742 = vmatpush.bf16.msra.mxu0 0
        %1743 = vmatpush.bf16.msra.mxu0 0
        %1744 = vmatpush.bf16.msra.mxu0 0
        %1745 = vmatpush.bf16.msra.mxu0 0
        %1746 = vmatpush.bf16.msra.mxu0 %v1734
        %1747 = vmatpush.bf16.msra.mxu0 %v1733
        %1748 = vmatmul.bf16.gmra.mxu0 %v1738
        %v1749 = vpop.f32.mrf.mxu0
        %v1750 = vadd.f32 %v1723, %v1749
        %v1751 = vpop.f32.mrf.mxu0
        %1752 = vdwg.mxu0
        %v1753 = vmul.f32 %v1750, 0.5
        %v1754 = vmul.f32 %v1750, 0.70710677
        %v1755 = vmul.f32 %v1754, %v1754
        %v1756 = vmin.f32 16.0, %v1755
        %v1757 = vmul.f32 %v1756, 2.1237322e-06
        %v1758 = vadd.f32 %v1757, 0.00028619796
        %v1759 = vmul.f32 %v1756, %v1758
        %v1760 = vadd.f32 %v1759, 0.0036580483
        %v1761 = vmul.f32 %v1756, %v1760
        %v1762 = vadd.f32 %v1761, 0.05243302
        %v1763 = vmul.f32 %v1756, %v1762
        %v1764 = vadd.f32 %v1763, 0.18741608
        %v1765 = vmul.f32 %v1756, %v1764
        %v1766 = vadd.f32 %v1765, 1.1283791
        %v1767 = vmul.f32 %v1754, %v1766
        %v1768 = vmul.f32 %v1756, 3.8918573e-05
        %v1769 = vadd.f32 %v1768, 0.001143296
        %v1770 = vmul.f32 %v1756, %v1769
        %v1771 = vadd.f32 %v1770, 0.014752088
        %v1772 = vmul.f32 %v1756, %v1771
        %v1773 = vadd.f32 %v1772, 0.112945676
        %v1774 = vmul.f32 %v1756, %v1773
        %v1775 = vadd.f32 %v1774, 0.4994258
        %v1776 = vmul.f32 %v1756, %v1775
        %v1777 = vadd.f32 %v1776, 1.0
        %v1778 = vrcp.pop %v1777
        %v1779 = vmul.f32 %v1777, %v1778
        %v1780 = vsub.f32 1.0, %v1779
        %v1781 = vmul.f32 %v1778, %v1780
        %v1782 = vadd.f32 %v1778, %v1781
        %vm1783 = vweird.f32 %v1777
        %vm1784 = vweird.f32 %v1778
        %vm1785 = vmor %vm1783, %vm1784
        %v1786 = vsel %vm1785, %v1778, %v1782
        %v1787 = vand.u32 2147483647, %v1777
        %vm1788 = vcmp.eq.f32.partialorder %v1787, 8.507059e+37
        %v1789 = vand.u32 %v1777, 2147483648
        %v1790 = vor.u32 1.1754944e-38, %v1789
        %v1791 = vsel %vm1788, %v1790, %v1786
        %v1792 = vmul.f32 %v1767, %v1791
        %v1793 = vmin.f32 %v1792, 1.0
        %v1794 = vmax.f32 %v1793, -1.0
        %v1795 = vadd.f32 %v1794, 1.0
        %v1796 = vmul.f32 %v1753, %v1795
        %v1797 = vpack.c.bf16 %v1796, %v1796
        %v1798 = vld [vmem:[%s16] sm:$0xf]
        %v1799 = vld [vmem:[%s16 + $0x4] sm:$0xf]
        %v1800 = vld [vmem:[%s16 + $0x8] sm:$0xf]
        %v1801 = vld [vmem:[%s16 + $0xc] sm:$0xf]
        %v1802 = vld [vmem:[%s16 + $0x10] sm:$0xf]
        %v1803 = vld [vmem:[%s16 + $0x14] sm:$0xf]
        %v1804 = vld [vmem:[%s16 + $0x18] sm:$0xf]
        %v1805 = vld [vmem:[%s16 + $0x1c] sm:$0xf]
        %v1806 = vld [vmem:[%s16 + $0x20] sm:$0xf]
        %v1807 = vld [vmem:[%s16 + $0x24] sm:$0xf]
        %v1808 = vld [vmem:[%s16 + $0x28] sm:$0xf]
        %v1809 = vld [vmem:[%s16 + $0x2c] sm:$0xf]
        %v1810 = vld [vmem:[%s16 + $0x30] sm:$0xf]
        %v1811 = vld [vmem:[%s16 + $0x34] sm:$0xf]
        %v1812 = vld [vmem:[%s16 + $0x38] sm:$0xf]
        %v1813 = vld [vmem:[%s16 + $0x3c] sm:$0xf]
        %v1814 = vld [vmem:[%s17] sm:$0x1]
        %v1816 = vperm.slane %v1814, 0
        %v1834 = vunpack.c.l.b16 %v1798
        %v1835 = vunpack.c.l.b16 %v1799
        %v1836 = vunpack.c.l.b16 %v1800
        %v1837 = vunpack.c.l.b16 %v1801
        %v1838 = vunpack.c.l.b16 %v1802
        %v1839 = vunpack.c.l.b16 %v1803
        %v1840 = vunpack.c.l.b16 %v1804
        %v1841 = vunpack.c.l.b16 %v1805
        %v1842 = vunpack.c.l.b16 %v1806
        %v1843 = vunpack.c.l.b16 %v1807
        %v1844 = vunpack.c.l.b16 %v1808
        %v1845 = vunpack.c.l.b16 %v1809
        %v1846 = vunpack.c.l.b16 %v1810
        %v1847 = vunpack.c.l.b16 %v1811
        %v1848 = vunpack.c.l.b16 %v1812
        %v1849 = vunpack.c.l.b16 %v1813
        %v1850 = vpack.c.b16 %v1835, %v1834
        %v1851 = vpack.c.b16 %v1837, %v1836
        %v1852 = vpack.c.b16 %v1839, %v1838
        %v1853 = vpack.c.b16 %v1841, %v1840
        %v1854 = vpack.c.b16 %v1843, %v1842
        %v1855 = vpack.c.b16 %v1845, %v1844
        %v1856 = vpack.c.b16 %v1847, %v1846
        %v1857 = vpack.c.b16 %v1849, %v1848
        %1866 = vmatpush.bf16.msra.mxu0 %v1857
        %1867 = vmatpush.bf16.msra.mxu0 %v1856
        %1868 = vmatpush.bf16.msra.mxu0 %v1855
        %1869 = vmatpush.bf16.msra.mxu0 %v1854
        %1870 = vmatpush.bf16.msra.mxu0 %v1853
        %1871 = vmatpush.bf16.msra.mxu0 %v1852
        %1872 = vmatpush.bf16.msra.mxu0 %v1851
        %1873 = vmatpush.bf16.msra.mxu0 %v1850
        %1874 = vmatmul.bf16.gmra.mxu0 %v1797
        %v1875 = vpop.f32.mrf.mxu0
        %v1876 = vadd.f32 %v1816, %v1875
        %v1877 = vpop.f32.mrf.mxu0
        %1878 = vdwg.mxu0
        %v1879 = vadd.f32 %v1683, %v1876
        %s1880 = sld [smem:[#allocation4]]
        %v1881 = vstv %s1880
        %v1882 = vmul.f32 %v1879, %v1881
        %1883 = vst.msk [vmem:[%s729] sm:$0xff] %vm1113, %v1882
        %s1884 = sand.u32 %s444, 1
        %s1885 = scalar_lea.sflag [#allocation7], %s1884
        %s1886 = sand.u32 %s444, 1
        %s1887 = smul.addr %s1886, 8
        %s1888 = scalar_lea.vmem [#allocation22], %s1887
        // Predicated region
        $region137: #{tpu_custom_call.1} parent=91 // pred_check
          %p1889 = pneg %p454
        $region138: #{tpu_custom_call.1} parent=91 // pred_check_branch
          %1891 = sbr.rel (%p1889) target = $region140
        $region139: #{tpu_custom_call.1} parent=91 // pred_region
          %1893 = vsyncadd %s1885, 0
          %s1894 = sadd.s32 %s44, %s43
          %s1895 = smul.addr %s1894, 8
          %s1896 = scalar_lea.hbm %s18, %s1895
          %s1898 = sshll.u32 %s1888, 4
          %s1899 = int_to_ptr.vmem [resolvable:$true] %s1898
          %s1900 = sshll.u32 %s1896, 4
          %s1901 = int_to_ptr.hbm [resolvable:$true] %s1900
          %1903 = dma.vmem_to_hbm [thread:$0]  %s1899, 128, %s1901, %s1885
        $region140: #{tpu_custom_call.1} parent=91 // pred_fallthru
          _
      $region92: #{tpu_custom_call.1} parent=5 // pred_fallthru
        _
      %p1904 = scmp.le.s32.totalorder 2, %s34
      // Predicated region
      $region141: #{tpu_custom_call.1} parent=5 // pred_check
        %p1905 = pneg %p1904
      $region142: #{tpu_custom_call.1} parent=5 // pred_check_branch
        %1907 = sbr.rel (%p1905) target = $region144
      $region143: #{tpu_custom_call.1} parent=5 // pred_region
        %s1908 = ssub.s32 %s34, 2
        // Predicated region
        $region145: #{tpu_custom_call.1} parent=143 // pred_check
          %p1909 = pneg %p460
        $region146: #{tpu_custom_call.1} parent=143 // pred_check_branch
          %1911 = sbr.rel (%p1909) target = $region148
        $region147: #{tpu_custom_call.1} parent=143 // pred_region
          %s1912 = sand.u32 %s445, 1
          %s1913 = scalar_lea.sflag [#allocation7], %s1912
          %s1914 = sand.u32 %s445, 1
          %s1915 = smul.addr %s1914, 8
          %s1916 = scalar_lea.vmem [#allocation22], %s1915
          %1918 = dma.done %s1913, 128
        $region148: #{tpu_custom_call.1} parent=143 // pred_fallthru
          _
      $region144: #{tpu_custom_call.1} parent=5 // pred_fallthru
        _
    $region6: #{tpu_custom_call.1} parent=1 // loop_footer
      %s38 = sadd.s32 1, %s34
    $region7: #{tpu_custom_call.1} parent=1 // loop_footer_branch
      %33 = sbr.rel target = $region3
    $region8: #{tpu_custom_call.1} parent=1 // loop_exit
      _
    %1919 = vsyncpa [#allocation6], 1
    %s1920 = scalar_lea.sflag [#allocation6], 1
    %1921 = vsyncpa %s1920, 1
    %1922 = vsyncpa [#allocation9], 1
    %1923 = vsyncpa [#allocation12], 1
    %1924 = vsyncpa [#allocation15], 1
    %1925 = vsyncpa [#allocation18], 1
    %1926 = vsyncpa [#allocation21], 1
    %1927 = vsyncpa [#allocation7], 1
    %s1928 = scalar_lea.sflag [#allocation7], 1
    %1929 = vsyncpa %s1928, 1

</llo_original>
